<compile_context>
chip_gen: v7x
topology: tpu7x:2x2x1
jax: 0.10.0
libtpu: 0.0.40
codegen_flags: <defaults>
</compile_context>

<pallas_src>
import numpy as np

import jax
import jax.numpy as jnp
from jax import lax
from jax.experimental import pallas as pl
from jax.experimental.pallas import tpu as pltpu


# Conservative per-step VMEM plan (valid on every generation once the
# vmem_limit_bytes below is applied; v7x physical VMEM is 64 MiB).
_VMEM_PLAN_BYTES = 32 * 1024 * 1024

# A · B^T (contract the last dim of both operands) — the q·k^T pattern used
# throughout the TPU flash-attention kernels.
_NT_DIMS = (((1,), (1,)), ((), ()))


def _make_kernel(nb, kh, kw, stride, Ho, Wo, Cin, Cout):
    """Build the per-grid-step conv kernel (all shape params are static)."""

    def kernel(x_ref, w_ref, o_ref):
        # x_ref: (nb, Hp, Wp, Cin)    padded NHWC images for this grid step
        # w_ref: (kh*kw, Cout, Cin)   fused sign(w1)-sign(w2), one (Cout, Cin) per tap
        # o_ref: (nb, Cout, Ho*Wo)    lane-dense output slab
        for b in range(nb):                                  # nb is small & static
            acc = jnp.zeros((Cout, Ho * Wo), jnp.float32)    # register accumulator
            for i in range(kh):
                for j in range(kw):
                    if stride == 1:
                        patch = x_ref[b, i:i + Ho, j:j + Wo, :]        # (Ho, Wo, Cin)
                    else:
                        # stride > 1: per-tap strided window (not exercised below;
                        # hoisting the H/W decimation out of the tap loop is a
                        # further optimization for strided configs).
                        patch = x_ref[b,
                                      pl.ds(i, Ho, stride=stride),
                                      pl.ds(j, Wo, stride=stride), :]
                    patch = jnp.reshape(patch, (Ho * Wo, Cin))
                    # (Cout, Cin) · (Ho*Wo, Cin)^T -> (Cout, Ho*Wo): the accumulator
                    # is already in output orientation, so no final transpose.
                    acc = acc + lax.dot_general(
                        w_ref[i * kw + j], patch, _NT_DIMS,
                        preferred_element_type=jnp.float32)
            o_ref[b] = acc.astype(o_ref.dtype)               # single store per image

    return kernel


def _pick_batch_block(N, Hp, Wp, Cin, Ho, Wo, Cout, act_itemsize, out_itemsize):
    """Largest NB dividing N that (a) keeps >= 2 parallel grid steps when N >= 2
    (v7x megacore), (b) fits the per-step VMEM plan (double-buffered input block +
    output slab), and (c) stops growing once per-step M = NB*Ho*Wo reaches ~1024."""
    def step_bytes(nb):
        return (2 * nb * Hp * Wp * Cin * act_itemsize          # double-buffered input
                + 2 * nb * Cout * Ho * Wo * out_itemsize)      # double-buffered output
    nb_best = 1
    for nb in range(1, N + 1):
        if N % nb:
            continue
        if N >= 2 and (N // nb) < 2:
            break
        if step_bytes(nb) > _VMEM_PLAN_BYTES:
            break
        nb_best = nb
        if nb * Ho * Wo >= 1024:
            break
    return nb_best


def ternary_conv(x, w1, w2, stride, padding, *, compute_dtype=jnp.bfloat16):
    """TernaryConv forward: conv2d(x, sign(w1)) - conv2d(x, sign(w2)). NCHW in/out.

    compute_dtype: in-kernel activation/weight dtype. The default (bfloat16)
    halves DMA traffic and matches the native v6e/v7x MXU dtype; sign(w1)-sign(w2)
    is exact in bf16 and accumulation is f32, so the only deviation from the f32
    reference is the bf16 rounding of x. Pass jnp.float32 for exact semantics.
    """
    N, Cin, H, W = x.shape
    Cout, Cin_w, kh, kw = w1.shape
    assert Cin_w == Cin and w2.shape == w1.shape

    Ho = (H + 2 * padding - kh) // stride + 1
    Wo = (W + 2 * padding - kw) // stride + 1
    Hp, Wp = H + 2 * padding, W + 2 * padding

    # Fused binarized weights, computed once outside the kernel.
    # SignFunction forward is torch.sign (sign(0) = 0), matching jnp.sign.
    # (Cout, Cin, kh, kw) -> (kh*kw, Cout, Cin): ws[i*kw+j, o, c] = sd[o, c, i, j].
    sd = jnp.sign(w1) - jnp.sign(w2)
    ws = sd.transpose(2, 3, 0, 1).reshape(kh * kw, Cout, Cin).astype(compute_dtype)

    # NCHW -> padded NHWC in the compute dtype (channels-last keeps the in-kernel
    # patch reshape layout-trivial). With allow_input_fusion on this operand, XLA
    # may fuse the cast/transpose/pad into the pallas_call input instead of
    # materializing xp in HBM.
    xp = jnp.pad(jnp.transpose(x.astype(compute_dtype), (0, 2, 3, 1)),
                 ((0, 0), (padding, padding), (padding, padding), (0, 0)))

    NB = _pick_batch_block(N, Hp, Wp, Cin, Ho, Wo, Cout,
                           np.dtype(compute_dtype).itemsize,
                           np.dtype(x.dtype).itemsize)

    kernel = _make_kernel(NB, kh, kw, stride, Ho, Wo, Cin, Cout)

    out = pl.pallas_call(
        kernel,
        out_shape=jax.ShapeDtypeStruct((N, Cout, Ho * Wo), x.dtype),
        grid=(N // NB,),
        in_specs=[
            pl.BlockSpec((NB, Hp, Wp, Cin), lambda n: (n, 0, 0, 0)),
            pl.BlockSpec((kh * kw, Cout, Cin), lambda n: (0, 0, 0)),  # resident
        ],
        out_specs=pl.BlockSpec((NB, Cout, Ho * Wo), lambda n: (n, 0, 0)),
        compiler_params=pltpu.CompilerParams(
            dimension_semantics=("parallel",),
            vmem_limit_bytes=_VMEM_PLAN_BYTES,
            allow_input_fusion=[True, False],
        ),
    )(xp, ws)

    # (N, Cout, Ho*Wo) -> (N, Cout, Ho, Wo) is a free, contiguous reshape (NCHW).
    return out.reshape(N, Cout, Ho, Wo)


def _reference(x, w1, w2, stride, padding):
    dn = ("NCHW", "OIHW", "NCHW")
    conv = lambda w: lax.conv_general_dilated(
        x, jnp.sign(w), window_strides=(stride, stride),
        padding=[(padding, padding), (padding, padding)],
        dimension_numbers=dn)
    return conv(w1) - conv(w2)


if __name__ == "__main__":
    key = jax.random.PRNGKey(0)
    k_x, k_w1, k_w2 = jax.random.split(key, 3)

    # Small shapes consistent with the module.
    N, Cin, H, W = 2, 4, 16, 16
    Cout, ksize, stride, padding = 8, 3, 1, 1

    x = jax.random.normal(k_x, (N, Cin, H, W), dtype=jnp.float32)
    # Module init is torch.rand(shape)*0.01; a symmetric uniform keeps the same
    # magnitude scale while actually exercising both signs.
    w1 = jax.random.uniform(k_w1, (Cout, Cin, ksize, ksize),
                            minval=-0.01, maxval=0.01, dtype=jnp.float32)
    w2 = jax.random.uniform(k_w2, (Cout, Cin, ksize, ksize),
                            minval=-0.01, maxval=0.01, dtype=jnp.float32)

    ref = jax.block_until_ready(_reference(x, w1, w2, stride, padding))

    # Exact-semantics check: f32 compute path matches the f32 reference tightly.
    out_f32 = jax.block_until_ready(
        ternary_conv(x, w1, w2, stride, padding, compute_dtype=jnp.float32))
    assert out_f32.shape == ref.shape, (out_f32.shape, ref.shape)
    assert jnp.allclose(out_f32, ref, atol=1e-4, rtol=1e-4), \
        float(jnp.max(jnp.abs(out_f32 - ref)))

    # Default (bf16 activations) perf path: weights are exact in bf16; the only
    # deviation from the f32 reference is the bf16 rounding of x.
    out_bf16 = jax.block_until_ready(ternary_conv(x, w1, w2, stride, padding))
    assert out_bf16.shape == ref.shape, (out_bf16.shape, ref.shape)
    assert jnp.allclose(out_bf16, ref, atol=0.15, rtol=0.02), \
        float(jnp.max(jnp.abs(out_bf16 - ref)))

    print("KERNEL_OK")
</pallas_src>

<mosaic_0001>
module attributes {stable_mosaic.version = 11 : i64} {
  func.func @kernel(%arg0: i32, %arg1: memref<1x18x18x4xf32, #tpu.memory_space<vmem>>, %arg2: memref<9x8x4xf32, #tpu.memory_space<vmem>>, %arg3: memref<1x8x256xf32, #tpu.memory_space<vmem>>) attributes {dimension_semantics = [#tpu.dimension_semantics<parallel>], iteration_bounds = array<i64: 2>, scalar_prefetch = 0 : i64, scratch_operands = 0 : i64, tpu.core_type = #tpu.core_type<tc>, window_params = [{transform_indices = @transform_0, window_bounds = array<i64: 1, 18, 18, 4>}, {pipeline_mode = #tpu.pipeline_mode<synchronous>, transform_indices = @transform_1, window_bounds = array<i64: 9, 8, 4>}, {transform_indices = @transform_2, window_bounds = array<i64: 1, 8, 256>}]} {
    %cst = arith.constant 0.000000e+00 : f32
    %0 = vector.broadcast %cst : f32 to vector<8x256xf32>
    %c0 = arith.constant 0 : index
    %c0_0 = arith.constant 0 : index
    %c0_1 = arith.constant 0 : index
    %c0_2 = arith.constant 0 : index
    %1 = vector.load %arg1[%c0, %c0_0, %c0_1, %c0_2] : memref<1x18x18x4xf32, #tpu.memory_space<vmem>>, vector<1x16x16x4xf32>
    %2 = vector.shape_cast %1 : vector<1x16x16x4xf32> to vector<16x16x4xf32>
    %3 = vector.shape_cast %2 : vector<16x16x4xf32> to vector<256x4xf32>
    %c0_3 = arith.constant 0 : index
    %c0_4 = arith.constant 0 : index
    %c0_5 = arith.constant 0 : index
    %4 = vector.load %arg2[%c0_3, %c0_4, %c0_5] : memref<9x8x4xf32, #tpu.memory_space<vmem>>, vector<1x8x4xf32>
    %5 = vector.shape_cast %4 : vector<1x8x4xf32> to vector<8x4xf32>
    %cst_6 = arith.constant dense<0.000000e+00> : vector<8x256xf32>
    %6 = tpu.matmul %5, %3, %cst_6 {dimension_numbers = #tpu.dot_dimension_numbers<[1], [1], [0], [0], [0, 0, 1, 0], [], []>} : vector<8x4xf32>, vector<256x4xf32>, vector<8x256xf32> -> vector<8x256xf32>
    %7 = arith.addf %0, %6 : vector<8x256xf32>
    %c0_7 = arith.constant 0 : index
    %c0_8 = arith.constant 0 : index
    %c1 = arith.constant 1 : index
    %c0_9 = arith.constant 0 : index
    %8 = vector.load %arg1[%c0_7, %c0_8, %c1, %c0_9] : memref<1x18x18x4xf32, #tpu.memory_space<vmem>>, vector<1x16x16x4xf32>
    %9 = vector.shape_cast %8 : vector<1x16x16x4xf32> to vector<16x16x4xf32>
    %10 = vector.shape_cast %9 : vector<16x16x4xf32> to vector<256x4xf32>
    %c1_10 = arith.constant 1 : index
    %c0_11 = arith.constant 0 : index
    %c0_12 = arith.constant 0 : index
    %11 = vector.load %arg2[%c1_10, %c0_11, %c0_12] : memref<9x8x4xf32, #tpu.memory_space<vmem>>, vector<1x8x4xf32>
    %12 = vector.shape_cast %11 : vector<1x8x4xf32> to vector<8x4xf32>
    %cst_13 = arith.constant dense<0.000000e+00> : vector<8x256xf32>
    %13 = tpu.matmul %12, %10, %cst_13 {dimension_numbers = #tpu.dot_dimension_numbers<[1], [1], [0], [0], [0, 0, 1, 0], [], []>} : vector<8x4xf32>, vector<256x4xf32>, vector<8x256xf32> -> vector<8x256xf32>
    %14 = arith.addf %7, %13 : vector<8x256xf32>
    %c0_14 = arith.constant 0 : index
    %c0_15 = arith.constant 0 : index
    %c2 = arith.constant 2 : index
    %c0_16 = arith.constant 0 : index
    %15 = vector.load %arg1[%c0_14, %c0_15, %c2, %c0_16] : memref<1x18x18x4xf32, #tpu.memory_space<vmem>>, vector<1x16x16x4xf32>
    %16 = vector.shape_cast %15 : vector<1x16x16x4xf32> to vector<16x16x4xf32>
    %17 = vector.shape_cast %16 : vector<16x16x4xf32> to vector<256x4xf32>
    %c2_17 = arith.constant 2 : index
    %c0_18 = arith.constant 0 : index
    %c0_19 = arith.constant 0 : index
    %18 = vector.load %arg2[%c2_17, %c0_18, %c0_19] : memref<9x8x4xf32, #tpu.memory_space<vmem>>, vector<1x8x4xf32>
    %19 = vector.shape_cast %18 : vector<1x8x4xf32> to vector<8x4xf32>
    %cst_20 = arith.constant dense<0.000000e+00> : vector<8x256xf32>
    %20 = tpu.matmul %19, %17, %cst_20 {dimension_numbers = #tpu.dot_dimension_numbers<[1], [1], [0], [0], [0, 0, 1, 0], [], []>} : vector<8x4xf32>, vector<256x4xf32>, vector<8x256xf32> -> vector<8x256xf32>
    %21 = arith.addf %14, %20 : vector<8x256xf32>
    %c0_21 = arith.constant 0 : index
    %c1_22 = arith.constant 1 : index
    %c0_23 = arith.constant 0 : index
    %c0_24 = arith.constant 0 : index
    %22 = vector.load %arg1[%c0_21, %c1_22, %c0_23, %c0_24] : memref<1x18x18x4xf32, #tpu.memory_space<vmem>>, vector<1x16x16x4xf32>
    %23 = vector.shape_cast %22 : vector<1x16x16x4xf32> to vector<16x16x4xf32>
    %24 = vector.shape_cast %23 : vector<16x16x4xf32> to vector<256x4xf32>
    %c3 = arith.constant 3 : index
    %c0_25 = arith.constant 0 : index
    %c0_26 = arith.constant 0 : index
    %25 = vector.load %arg2[%c3, %c0_25, %c0_26] : memref<9x8x4xf32, #tpu.memory_space<vmem>>, vector<1x8x4xf32>
    %26 = vector.shape_cast %25 : vector<1x8x4xf32> to vector<8x4xf32>
    %cst_27 = arith.constant dense<0.000000e+00> : vector<8x256xf32>
    %27 = tpu.matmul %26, %24, %cst_27 {dimension_numbers = #tpu.dot_dimension_numbers<[1], [1], [0], [0], [0, 0, 1, 0], [], []>} : vector<8x4xf32>, vector<256x4xf32>, vector<8x256xf32> -> vector<8x256xf32>
    %28 = arith.addf %21, %27 : vector<8x256xf32>
    %c0_28 = arith.constant 0 : index
    %c1_29 = arith.constant 1 : index
    %c1_30 = arith.constant 1 : index
    %c0_31 = arith.constant 0 : index
    %29 = vector.load %arg1[%c0_28, %c1_29, %c1_30, %c0_31] : memref<1x18x18x4xf32, #tpu.memory_space<vmem>>, vector<1x16x16x4xf32>
    %30 = vector.shape_cast %29 : vector<1x16x16x4xf32> to vector<16x16x4xf32>
    %31 = vector.shape_cast %30 : vector<16x16x4xf32> to vector<256x4xf32>
    %c4 = arith.constant 4 : index
    %c0_32 = arith.constant 0 : index
    %c0_33 = arith.constant 0 : index
    %32 = vector.load %arg2[%c4, %c0_32, %c0_33] : memref<9x8x4xf32, #tpu.memory_space<vmem>>, vector<1x8x4xf32>
    %33 = vector.shape_cast %32 : vector<1x8x4xf32> to vector<8x4xf32>
    %cst_34 = arith.constant dense<0.000000e+00> : vector<8x256xf32>
    %34 = tpu.matmul %33, %31, %cst_34 {dimension_numbers = #tpu.dot_dimension_numbers<[1], [1], [0], [0], [0, 0, 1, 0], [], []>} : vector<8x4xf32>, vector<256x4xf32>, vector<8x256xf32> -> vector<8x256xf32>
    %35 = arith.addf %28, %34 : vector<8x256xf32>
    %c0_35 = arith.constant 0 : index
    %c1_36 = arith.constant 1 : index
    %c2_37 = arith.constant 2 : index
    %c0_38 = arith.constant 0 : index
    %36 = vector.load %arg1[%c0_35, %c1_36, %c2_37, %c0_38] : memref<1x18x18x4xf32, #tpu.memory_space<vmem>>, vector<1x16x16x4xf32>
    %37 = vector.shape_cast %36 : vector<1x16x16x4xf32> to vector<16x16x4xf32>
    %38 = vector.shape_cast %37 : vector<16x16x4xf32> to vector<256x4xf32>
    %c5 = arith.constant 5 : index
    %c0_39 = arith.constant 0 : index
    %c0_40 = arith.constant 0 : index
    %39 = vector.load %arg2[%c5, %c0_39, %c0_40] : memref<9x8x4xf32, #tpu.memory_space<vmem>>, vector<1x8x4xf32>
    %40 = vector.shape_cast %39 : vector<1x8x4xf32> to vector<8x4xf32>
    %cst_41 = arith.constant dense<0.000000e+00> : vector<8x256xf32>
    %41 = tpu.matmul %40, %38, %cst_41 {dimension_numbers = #tpu.dot_dimension_numbers<[1], [1], [0], [0], [0, 0, 1, 0], [], []>} : vector<8x4xf32>, vector<256x4xf32>, vector<8x256xf32> -> vector<8x256xf32>
    %42 = arith.addf %35, %41 : vector<8x256xf32>
    %c0_42 = arith.constant 0 : index
    %c2_43 = arith.constant 2 : index
    %c0_44 = arith.constant 0 : index
    %c0_45 = arith.constant 0 : index
    %43 = vector.load %arg1[%c0_42, %c2_43, %c0_44, %c0_45] : memref<1x18x18x4xf32, #tpu.memory_space<vmem>>, vector<1x16x16x4xf32>
    %44 = vector.shape_cast %43 : vector<1x16x16x4xf32> to vector<16x16x4xf32>
    %45 = vector.shape_cast %44 : vector<16x16x4xf32> to vector<256x4xf32>
    %c6 = arith.constant 6 : index
    %c0_46 = arith.constant 0 : index
    %c0_47 = arith.constant 0 : index
    %46 = vector.load %arg2[%c6, %c0_46, %c0_47] : memref<9x8x4xf32, #tpu.memory_space<vmem>>, vector<1x8x4xf32>
    %47 = vector.shape_cast %46 : vector<1x8x4xf32> to vector<8x4xf32>
    %cst_48 = arith.constant dense<0.000000e+00> : vector<8x256xf32>
    %48 = tpu.matmul %47, %45, %cst_48 {dimension_numbers = #tpu.dot_dimension_numbers<[1], [1], [0], [0], [0, 0, 1, 0], [], []>} : vector<8x4xf32>, vector<256x4xf32>, vector<8x256xf32> -> vector<8x256xf32>
    %49 = arith.addf %42, %48 : vector<8x256xf32>
    %c0_49 = arith.constant 0 : index
    %c2_50 = arith.constant 2 : index
    %c1_51 = arith.constant 1 : index
    %c0_52 = arith.constant 0 : index
    %50 = vector.load %arg1[%c0_49, %c2_50, %c1_51, %c0_52] : memref<1x18x18x4xf32, #tpu.memory_space<vmem>>, vector<1x16x16x4xf32>
    %51 = vector.shape_cast %50 : vector<1x16x16x4xf32> to vector<16x16x4xf32>
    %52 = vector.shape_cast %51 : vector<16x16x4xf32> to vector<256x4xf32>
    %c7 = arith.constant 7 : index
    %c0_53 = arith.constant 0 : index
    %c0_54 = arith.constant 0 : index
    %53 = vector.load %arg2[%c7, %c0_53, %c0_54] : memref<9x8x4xf32, #tpu.memory_space<vmem>>, vector<1x8x4xf32>
    %54 = vector.shape_cast %53 : vector<1x8x4xf32> to vector<8x4xf32>
    %cst_55 = arith.constant dense<0.000000e+00> : vector<8x256xf32>
    %55 = tpu.matmul %54, %52, %cst_55 {dimension_numbers = #tpu.dot_dimension_numbers<[1], [1], [0], [0], [0, 0, 1, 0], [], []>} : vector<8x4xf32>, vector<256x4xf32>, vector<8x256xf32> -> vector<8x256xf32>
    %56 = arith.addf %49, %55 : vector<8x256xf32>
    %c0_56 = arith.constant 0 : index
    %c2_57 = arith.constant 2 : index
    %c2_58 = arith.constant 2 : index
    %c0_59 = arith.constant 0 : index
    %57 = vector.load %arg1[%c0_56, %c2_57, %c2_58, %c0_59] : memref<1x18x18x4xf32, #tpu.memory_space<vmem>>, vector<1x16x16x4xf32>
    %58 = vector.shape_cast %57 : vector<1x16x16x4xf32> to vector<16x16x4xf32>
    %59 = vector.shape_cast %58 : vector<16x16x4xf32> to vector<256x4xf32>
    %c8 = arith.constant 8 : index
    %c0_60 = arith.constant 0 : index
    %c0_61 = arith.constant 0 : index
    %60 = vector.load %arg2[%c8, %c0_60, %c0_61] : memref<9x8x4xf32, #tpu.memory_space<vmem>>, vector<1x8x4xf32>
    %61 = vector.shape_cast %60 : vector<1x8x4xf32> to vector<8x4xf32>
    %cst_62 = arith.constant dense<0.000000e+00> : vector<8x256xf32>
    %62 = tpu.matmul %61, %59, %cst_62 {dimension_numbers = #tpu.dot_dimension_numbers<[1], [1], [0], [0], [0, 0, 1, 0], [], []>} : vector<8x4xf32>, vector<256x4xf32>, vector<8x256xf32> -> vector<8x256xf32>
    %63 = arith.addf %56, %62 : vector<8x256xf32>
    %c0_63 = arith.constant 0 : index
    %c0_64 = arith.constant 0 : index
    %c0_65 = arith.constant 0 : index
    %64 = vector.load %arg3[%c0_63, %c0_64, %c0_65] : memref<1x8x256xf32, #tpu.memory_space<vmem>>, vector<1x8x256xf32>
    %65 = vector.shape_cast %64 : vector<1x8x256xf32> to vector<8x256xf32>
    %66 = vector.shape_cast %63 : vector<8x256xf32> to vector<1x8x256xf32>
    tpu.vector_store %arg3[%c0_63, %c0_64, %c0_65], %66 {strides = array<i32>} : memref<1x8x256xf32, #tpu.memory_space<vmem>>, vector<1x8x256xf32>,
    return
  }
  func.func @transform_0(%arg0: i32) -> (i32, i32, i32, i32) {
    %c0_i32 = arith.constant 0 : i32
    %c0_i32_0 = arith.constant 0 : i32
    %c0_i32_1 = arith.constant 0 : i32
    %c0_i32_2 = arith.constant 0 : i32
    return %arg0, %c0_i32, %c0_i32_0, %c0_i32_1 : i32, i32, i32, i32
  }
  func.func @transform_1(%arg0: i32) -> (i32, i32, i32) {
    %c0_i32 = arith.constant 0 : i32
    %c0_i32_0 = arith.constant 0 : i32
    %c0_i32_1 = arith.constant 0 : i32
    %c0_i32_2 = arith.constant 0 : i32
    return %c0_i32, %c0_i32_0, %c0_i32_1 : i32, i32, i32
  }
  func.func @transform_2(%arg0: i32) -> (i32, i32, i32) {
    %c0_i32 = arith.constant 0 : i32
    %c0_i32_0 = arith.constant 0 : i32
    %c0_i32_1 = arith.constant 0 : i32
    return %arg0, %c0_i32, %c0_i32_0 : i32, i32, i32
  }
}

</mosaic_0001>

<llo_original>
// kernel: tpu_custom_call.1
$region0: #{tpu_custom_call.1}
  #allocation0 [shape = 'u32[]', space=smem, size = 0x4, offset = 0x4, fixed_abs, tag = 'smem constant byte address 0x4 - core index']
  #allocation1 [shape = 'u32[144,128]{1,0:T(1,128)}', space=vmem, size = 0x12000, scoped, tag = 'internal scratch']
  %s0 = inlined_call_operand.vmem [shape: f32[2,18,18,4], index: 0, kind: input, shape index: {}]
  %s1 = inlined_call_operand.vmem [shape: f32[9,8,4], index: 1, kind: input, shape index: {}]
  %s2 = inlined_call_operand.hbm [shape: f32[2,8,256], index: 2, kind: output, shape index: {}]
  %s3 = sld [smem:[#allocation0]]
  $region41: #{tpu_custom_call.1} parent=0
    _
  %s5 = ssub.s32 1, %s3
  %s6 = scalar_select 0, %s5, %s3
  $region1: #{tpu_custom_call.1} parent=0
    #allocation2 [shape = 'u8[16384]{0}', space=vmem, size = 0x4000, scoped, tag = 'output window, operand 0']
    #allocation3 [shape = 's32[2]{0}', space=sflag, size = 0x8, scoped, tag = 'scoped memory for tpu_custom_call.1']
    %7 = vsyncpa [#allocation3], 0
    %s8 = scalar_lea.sflag [#allocation3], 1
    %9 = vsyncpa %s8, 0
    loop: start=0, step=1, limit=4
    $region2: #{tpu_custom_call.1} parent=1 // loop_pre_header
      _
    $region3: #{tpu_custom_call.1} parent=1 // loop_header
      %s11 = sphi 0, %s15
      %p12 = scmp.ge.s32.totalorder %s11, 4
      %s21 = sphi 0, %s23
      %s24 = sphi 0, %s21
      %s25 = sphi 0, %s24
      %s41 = sphi 0, %s25
      %s45 = sphi 0, %s45
      %s47 = sphi 0, %s45
      %s48 = sphi 0, %s47
      %s62 = sphi 0, %s48
      %s68 = sphi 0, %s70
      %s71 = sphi 0, %s68
      %s72 = sphi 0, %s71
      %s88 = sphi 0, %s72
    $region4: #{tpu_custom_call.1} parent=1 // loop_header_branch
      %14 = sbr.rel (%p12) target = $region8
    $region5: #{tpu_custom_call.1} parent=1 // loop_body
      %s16 = ssub.s32 %s11, 1
      %s17 = ssub.s32 %s11, 2
      %s18 = sadd.s32 %s11, 1
      %s19 = ssub.s32 %s11, %s18
      %p20 = scmp.eq.s32.totalorder %s19, 0
      %s22 = sadd.s32 %s21, 1
      %s23 = scalar_select %p20, %s21, %s22
      %p26 = pneg %p20
      %p27 = scmp.eq.s32.totalorder %s11, 1
      %p28 = por %p26, %p27
      %p29 = scmp.ne.s32.totalorder %s21, %s24
      %p30 = scmp.eq.s32.totalorder %s11, 0
      %p31 = por %p29, %p30
      %p32 = scmp.ne.s32.totalorder %s21, %s24
      %p33 = scmp.eq.s32.totalorder %s16, 1
      %p34 = por %p32, %p33
      %p35 = scmp.ne.s32.totalorder %s24, %s25
      %p36 = scmp.eq.s32.totalorder %s16, 0
      %p37 = por %p35, %p36
      %p38 = scmp.ne.s32.totalorder %s24, %s25
      %p39 = scmp.eq.s32.totalorder %s17, 1
      %p40 = por %p38, %p39
      %p42 = scmp.ne.s32.totalorder %s25, %s41
      %p43 = scmp.eq.s32.totalorder %s17, 0
      %p44 = por %p42, %p43
      %s46 = sadd.s32 %s45, 1
      %p49 = scmp.eq.s32.totalorder %s11, 1
      %p50 = scmp.ne.s32.totalorder %s45, %s47
      %p51 = scmp.eq.s32.totalorder %s11, 0
      %p52 = por %p50, %p51
      %p53 = scmp.ne.s32.totalorder %s45, %s47
      %p54 = scmp.eq.s32.totalorder %s16, 1
      %p55 = por %p53, %p54
      %p56 = scmp.ne.s32.totalorder %s47, %s48
      %p57 = scmp.eq.s32.totalorder %s16, 0
      %p58 = por %p56, %p57
      %p59 = scmp.ne.s32.totalorder %s47, %s48
      %p60 = scmp.eq.s32.totalorder %s17, 1
      %p61 = por %p59, %p60
      %p63 = scmp.ne.s32.totalorder %s48, %s62
      %p64 = scmp.eq.s32.totalorder %s17, 0
      %p65 = por %p63, %p64
      %s66 = ssub.s32 %s11, %s18
      %p67 = scmp.eq.s32.totalorder %s66, 0
      %s69 = sadd.s32 %s68, 1
      %s70 = scalar_select %p67, %s68, %s69
      %p73 = pneg %p67
      %p74 = scmp.eq.s32.totalorder %s11, 1
      %p75 = por %p73, %p74
      %p76 = scmp.ne.s32.totalorder %s68, %s71
      %p77 = scmp.eq.s32.totalorder %s11, 0
      %p78 = por %p76, %p77
      %p79 = scmp.ne.s32.totalorder %s68, %s71
      %p80 = scmp.eq.s32.totalorder %s16, 1
      %p81 = por %p79, %p80
      %p82 = scmp.ne.s32.totalorder %s71, %s72
      %p83 = scmp.eq.s32.totalorder %s16, 0
      %p84 = por %p82, %p83
      %p85 = scmp.ne.s32.totalorder %s71, %s72
      %p86 = scmp.eq.s32.totalorder %s17, 1
      %p87 = por %p85, %p86
      %p89 = scmp.ne.s32.totalorder %s72, %s88
      %p90 = scmp.eq.s32.totalorder %s17, 0
      %p91 = por %p89, %p90
      %p92 = scmp.le.s32.totalorder 1, %s11
      %p93 = scmp.lt.s32.totalorder %s11, 3
      %p94 = pnand %p92, %p93
      %p95 = pneg %p94
      // Predicated region
      $region9: #{tpu_custom_call.1} parent=5 // pred_check
        _
      $region10: #{tpu_custom_call.1} parent=5 // pred_check_branch
        %97 = sbr.rel (%p94) target = $region12
      $region11: #{tpu_custom_call.1} parent=5 // pred_region
        %s98 = ssub.s32 %s11, 1
        // Predicated region
        $region13: #{tpu_custom_call.1} parent=11 // pred_check
          %p99 = pneg %p58
        $region14: #{tpu_custom_call.1} parent=11 // pred_check_branch
          %101 = sbr.rel (%p99) target = $region16
        $region15: #{tpu_custom_call.1} parent=11 // pred_region
          _
        $region16: #{tpu_custom_call.1} parent=11 // pred_fallthru
          _
      $region12: #{tpu_custom_call.1} parent=5 // pred_fallthru
        _
      %p102 = scmp.lt.s32.totalorder %s11, 2
      // Predicated region
      $region17: #{tpu_custom_call.1} parent=5 // pred_check
        %p103 = pneg %p102
      $region18: #{tpu_custom_call.1} parent=5 // pred_check_branch
        %105 = sbr.rel (%p103) target = $region20
      $region19: #{tpu_custom_call.1} parent=5 // pred_region
        // Predicated region
        $region21: #{tpu_custom_call.1} parent=19 // pred_check
          %p106 = pneg %p31
        $region22: #{tpu_custom_call.1} parent=19 // pred_check_branch
          %108 = sbr.rel (%p106) target = $region24
        $region23: #{tpu_custom_call.1} parent=19 // pred_region
          %p109 = scmp.lt.s32.totalorder %s11, 1
          %s110 = scalar_select %p109, %s11, 1
          %s111 = smul.addr %s110, 54
          %s112 = smul.addr %s111, 8
          %s113 = scalar_lea.vmem %s0, %s112
        $region24: #{tpu_custom_call.1} parent=19 // pred_fallthru
          _
      $region20: #{tpu_custom_call.1} parent=5 // pred_fallthru
        _
      %p114 = scmp.le.s32.totalorder 1, %s11
      %p115 = scmp.lt.s32.totalorder %s11, 3
      %p116 = pnand %p114, %p115
      %p117 = pneg %p116
      // Predicated region
      $region25: #{tpu_custom_call.1} parent=5 // pred_check
        _
      $region26: #{tpu_custom_call.1} parent=5 // pred_check_branch
        %119 = sbr.rel (%p116) target = $region28
      $region27: #{tpu_custom_call.1} parent=5 // pred_region
        %s120 = ssub.s32 %s11, 1
        %p121 = scmp.lt.s32.totalorder %s16, 1
        %s122 = scalar_select %p121, %s16, 1
        %s123 = smul.addr %s122, 54
        %s124 = smul.addr %s123, 8
        %s125 = scalar_lea.vmem %s0, %s124
        %p126 = pneg %p37
        %p127 = pneg %p34
        %p128 = pneg %p58
        %p129 = pneg %p55
        %p130 = pneg %p84
        %p131 = pneg %p81
        %s132 = sand.u32 %s71, 1
        %s133 = scalar_lea.sflag [#allocation3], %s132
        %s134 = sand.u32 %s71, 1
        %s135 = smul.addr %s134, 16
        %s136 = scalar_lea.vmem [#allocation2], %s135
        %p137 = scmp.lt.s32.totalorder %s16, 1
        %s138 = scalar_select %p137, %s16, 1
        %s139 = smul.addr %s138, 54
        %s140 = smul.addr %s139, 8
        %s141 = scalar_lea.vmem %s0, %s140
        %v142 = vld [vmem:[%s141] sm:$0xff]
        %v143 = vld [vmem:[%s141 + $0x8] sm:$0xff]
        %v144 = vld [vmem:[%s141 + $0x18] sm:$0xff]
        %v145 = vld [vmem:[%s141 + $0x20] sm:$0xff]
        %v146 = vld [vmem:[%s141 + $0x30] sm:$0xff]
        %v147 = vld [vmem:[%s141 + $0x38] sm:$0xff]
        %v148 = vld [vmem:[%s141 + $0x48] sm:$0xff]
        %v149 = vld [vmem:[%s141 + $0x50] sm:$0xff]
        %v150 = vld [vmem:[%s141 + $0x60] sm:$0xff]
        %v151 = vld [vmem:[%s141 + $0x68] sm:$0xff]
        %v152 = vld [vmem:[%s141 + $0x78] sm:$0xff]
        %v153 = vld [vmem:[%s141 + $0x80] sm:$0xff]
        %v154 = vld [vmem:[%s141 + $0x90] sm:$0xff]
        %v155 = vld [vmem:[%s141 + $0x98] sm:$0xff]
        %v156 = vld [vmem:[%s141 + $0xa8] sm:$0xff]
        %v157 = vld [vmem:[%s141 + $0xb0] sm:$0xff]
        %v158 = vld [vmem:[%s141 + $0xc0] sm:$0xff]
        %v159 = vld [vmem:[%s141 + $0xc8] sm:$0xff]
        %v160 = vld [vmem:[%s141 + $0xd8] sm:$0xff]
        %v161 = vld [vmem:[%s141 + $0xe0] sm:$0xff]
        %v162 = vld [vmem:[%s141 + $0xf0] sm:$0xff]
        %v163 = vld [vmem:[%s141 + $0xf8] sm:$0xff]
        %v164 = vld [vmem:[%s141 + $0x108] sm:$0xff]
        %v165 = vld [vmem:[%s141 + $0x110] sm:$0xff]
        %v166 = vld [vmem:[%s141 + $0x120] sm:$0xff]
        %v167 = vld [vmem:[%s141 + $0x128] sm:$0xff]
        %v168 = vld [vmem:[%s141 + $0x138] sm:$0xff]
        %v169 = vld [vmem:[%s141 + $0x140] sm:$0xff]
        %v170 = vld [vmem:[%s141 + $0x150] sm:$0xff]
        %v171 = vld [vmem:[%s141 + $0x158] sm:$0xff]
        %v172 = vld [vmem:[%s141 + $0x168] sm:$0xff]
        %v173 = vld [vmem:[%s141 + $0x170] sm:$0xff]
        %v174 = vld [vmem:[%s1] sm:$0xff]
        %v175 = vld [vmem:[%s141 + $0x1] sm:$0xff]
        %v176 = vld [vmem:[%s141 + $0x9] sm:$0xff]
        %v177 = vld [vmem:[%s141 + $0x19] sm:$0xff]
        %v178 = vld [vmem:[%s141 + $0x21] sm:$0xff]
        %v179 = vld [vmem:[%s141 + $0x31] sm:$0xff]
        %v180 = vld [vmem:[%s141 + $0x39] sm:$0xff]
        %v181 = vld [vmem:[%s141 + $0x49] sm:$0xff]
        %v182 = vld [vmem:[%s141 + $0x51] sm:$0xff]
        %v183 = vld [vmem:[%s141 + $0x61] sm:$0xff]
        %v184 = vld [vmem:[%s141 + $0x69] sm:$0xff]
        %v185 = vld [vmem:[%s141 + $0x79] sm:$0xff]
        %v186 = vld [vmem:[%s141 + $0x81] sm:$0xff]
        %v187 = vld [vmem:[%s141 + $0x91] sm:$0xff]
        %v188 = vld [vmem:[%s141 + $0x99] sm:$0xff]
        %v189 = vld [vmem:[%s141 + $0xa9] sm:$0xff]
        %v190 = vld [vmem:[%s141 + $0xb1] sm:$0xff]
        %v191 = vld [vmem:[%s141 + $0xc1] sm:$0xff]
        %v192 = vld [vmem:[%s141 + $0xc9] sm:$0xff]
        %v193 = vld [vmem:[%s141 + $0xd9] sm:$0xff]
        %v194 = vld [vmem:[%s141 + $0xe1] sm:$0xff]
        %v195 = vld [vmem:[%s141 + $0xf1] sm:$0xff]
        %v196 = vld [vmem:[%s141 + $0xf9] sm:$0xff]
        %v197 = vld [vmem:[%s141 + $0x109] sm:$0xff]
        %v198 = vld [vmem:[%s141 + $0x111] sm:$0xff]
        %v199 = vld [vmem:[%s141 + $0x121] sm:$0xff]
        %v200 = vld [vmem:[%s141 + $0x129] sm:$0xff]
        %v201 = vld [vmem:[%s141 + $0x139] sm:$0xff]
        %v202 = vld [vmem:[%s141 + $0x141] sm:$0xff]
        %v203 = vld [vmem:[%s141 + $0x151] sm:$0xff]
        %v204 = vld [vmem:[%s141 + $0x159] sm:$0xff]
        %v205 = vld [vmem:[%s141 + $0x169] sm:$0xff]
        %v206 = vld [vmem:[%s141 + $0x171] sm:$0xff]
        %s207 = scalar_lea.vmem %s1, 8
        %v208 = vld [vmem:[%s207] sm:$0xff]
        %vm209 = vcmask 31744
        %v211 = vsel %vm209, %v208, 0
        %v214 = vsel %vm209, %v175, 0
        %v217 = vsel %vm209, %v176, 0
        %v220 = vsel %vm209, %v177, 0
        %v223 = vsel %vm209, %v178, 0
        %v226 = vsel %vm209, %v179, 0
        %v229 = vsel %vm209, %v180, 0
        %v232 = vsel %vm209, %v181, 0
        %v235 = vsel %vm209, %v182, 0
        %v238 = vsel %vm209, %v183, 0
        %v241 = vsel %vm209, %v184, 0
        %v244 = vsel %vm209, %v185, 0
        %v247 = vsel %vm209, %v186, 0
        %v250 = vsel %vm209, %v187, 0
        %v253 = vsel %vm209, %v188, 0
        %v256 = vsel %vm209, %v189, 0
        %v259 = vsel %vm209, %v190, 0
        %v262 = vsel %vm209, %v191, 0
        %v265 = vsel %vm209, %v192, 0
        %v268 = vsel %vm209, %v193, 0
        %v271 = vsel %vm209, %v194, 0
        %v274 = vsel %vm209, %v195, 0
        %v277 = vsel %vm209, %v196, 0
        %v280 = vsel %vm209, %v197, 0
        %v283 = vsel %vm209, %v198, 0
        %v286 = vsel %vm209, %v199, 0
        %v289 = vsel %vm209, %v200, 0
        %v292 = vsel %vm209, %v201, 0
        %v295 = vsel %vm209, %v202, 0
        %v298 = vsel %vm209, %v203, 0
        %v301 = vsel %vm209, %v204, 0
        %v304 = vsel %vm209, %v205, 0
        %v307 = vsel %vm209, %v206, 0
        %309 = vmatprep.subr.mxu0 0.0
        %310 = vmatpush1.xpose.msra.mxu0 %v214
        %311 = vmatprep.subr.mxu0 0.0
        %312 = vmatpush1.xpose.msra.mxu0 %v217
        %313 = vmatprep.subr.mxu0 0.0
        %314 = vmatpush1.xpose.msra.mxu0 %v220
        %315 = vmatprep.subr.mxu0 0.0
        %316 = vmatpush1.xpose.msra.mxu0 %v223
        %317 = vmatprep.subr.mxu0 0.0
        %318 = vmatpush1.xpose.msra.mxu0 %v226
        %319 = vmatprep.subr.mxu0 0.0
        %320 = vmatpush1.xpose.msra.mxu0 %v229
        %321 = vmatprep.subr.mxu0 0.0
        %322 = vmatpush1.xpose.msra.mxu0 %v232
        %323 = vmatprep.subr.mxu0 0.0
        %324 = vmatpush1.xpose.msra.mxu0 %v235
        %325 = vmatprep.subr.mxu0 0.0
        %326 = vmatpush1.xpose.msra.mxu0 %v238
        %327 = vmatprep.subr.mxu0 0.0
        %328 = vmatpush1.xpose.msra.mxu0 %v241
        %329 = vmatprep.subr.mxu0 0.0
        %330 = vmatpush1.xpose.msra.mxu0 %v244
        %331 = vmatprep.subr.mxu0 0.0
        %332 = vmatpush1.xpose.msra.mxu0 %v247
        %333 = vmatprep.subr.mxu0 0.0
        %334 = vmatpush1.xpose.msra.mxu0 %v250
        %335 = vmatprep.subr.mxu0 0.0
        %336 = vmatpush1.xpose.msra.mxu0 %v253
        %337 = vmatprep.subr.mxu0 0.0
        %338 = vmatpush1.xpose.msra.mxu0 %v256
        %339 = vmatprep.subr.mxu0 0.0
        %340 = vmatpush1.xpose.msra.mxu0 %v259
        %341 = vmatprep.subr.mxu0 0.0
        %342 = vmatpush1.xpose.msra.mxu0 %v262
        %343 = vmatprep.subr.mxu0 0.0
        %344 = vmatpush1.xpose.msra.mxu0 %v265
        %345 = vmatprep.subr.mxu0 0.0
        %346 = vmatpush1.xpose.msra.mxu0 %v268
        %347 = vmatprep.subr.mxu0 0.0
        %348 = vmatpush1.xpose.msra.mxu0 %v271
        %349 = vmatprep.subr.mxu0 0.0
        %350 = vmatpush1.xpose.msra.mxu0 %v274
        %351 = vmatprep.subr.mxu0 0.0
        %352 = vmatpush1.xpose.msra.mxu0 %v277
        %353 = vmatprep.subr.mxu0 0.0
        %354 = vmatpush1.xpose.msra.mxu0 %v280
        %355 = vmatprep.subr.mxu0 0.0
        %356 = vmatpush1.xpose.msra.mxu0 %v283
        %357 = vmatprep.subr.mxu0 0.0
        %358 = vmatpush1.xpose.msra.mxu0 %v286
        %359 = vmatprep.subr.mxu0 0.0
        %360 = vmatpush1.xpose.msra.mxu0 %v289
        %361 = vmatprep.subr.mxu0 0.0
        %362 = vmatpush1.xpose.msra.mxu0 %v292
        %363 = vmatprep.subr.mxu0 0.0
        %364 = vmatpush1.xpose.msra.mxu0 %v295
        %365 = vmatprep.subr.mxu0 0.0
        %366 = vmatpush1.xpose.msra.mxu0 %v298
        %367 = vmatprep.subr.mxu0 0.0
        %368 = vmatpush1.xpose.msra.mxu0 %v301
        %369 = vmatprep.subr.mxu0 0.0
        %370 = vmatpush1.xpose.msra.mxu0 %v304
        %371 = vmatprep.subr.mxu0 0.0
        %372 = vmatpush1.xpose.msra.mxu0 %v307
        %373 = vmatprep.mubr.f32.mxu0 0.0
        %374 = vmatmul.mubr.f32.gmra.mrb[0].mxu0 %v211
        %v375 = vpop.f32.mrb[0].mxu0
        %v376 = vadd.f32 0.0, %v375
        %v377 = vpop.f32.mrb[0].mxu0
        %v378 = vadd.f32 0.0, %v377
        %379 = vdwg.mxu0
        %v381 = vsel %vm209, %v174, 0
        %v384 = vsel %vm209, %v142, 0
        %v387 = vsel %vm209, %v143, 0
        %v390 = vsel %vm209, %v144, 0
        %v393 = vsel %vm209, %v145, 0
        %v396 = vsel %vm209, %v146, 0
        %v399 = vsel %vm209, %v147, 0
        %v402 = vsel %vm209, %v148, 0
        %v405 = vsel %vm209, %v149, 0
        %v408 = vsel %vm209, %v150, 0
        %v411 = vsel %vm209, %v151, 0
        %v414 = vsel %vm209, %v152, 0
        %v417 = vsel %vm209, %v153, 0
        %v420 = vsel %vm209, %v154, 0
        %v423 = vsel %vm209, %v155, 0
        %v426 = vsel %vm209, %v156, 0
        %v429 = vsel %vm209, %v157, 0
        %v432 = vsel %vm209, %v158, 0
        %v435 = vsel %vm209, %v159, 0
        %v438 = vsel %vm209, %v160, 0
        %v441 = vsel %vm209, %v161, 0
        %v444 = vsel %vm209, %v162, 0
        %v447 = vsel %vm209, %v163, 0
        %v450 = vsel %vm209, %v164, 0
        %v453 = vsel %vm209, %v165, 0
        %v456 = vsel %vm209, %v166, 0
        %v459 = vsel %vm209, %v167, 0
        %v462 = vsel %vm209, %v168, 0
        %v465 = vsel %vm209, %v169, 0
        %v468 = vsel %vm209, %v170, 0
        %v471 = vsel %vm209, %v171, 0
        %v474 = vsel %vm209, %v172, 0
        %v477 = vsel %vm209, %v173, 0
        %479 = vmatprep.subr.mxu0 0.0
        %480 = vmatpush1.xpose.msra.mxu0 %v384
        %481 = vmatprep.subr.mxu0 0.0
        %482 = vmatpush1.xpose.msra.mxu0 %v387
        %483 = vmatprep.subr.mxu0 0.0
        %484 = vmatpush1.xpose.msra.mxu0 %v390
        %485 = vmatprep.subr.mxu0 0.0
        %486 = vmatpush1.xpose.msra.mxu0 %v393
        %487 = vmatprep.subr.mxu0 0.0
        %488 = vmatpush1.xpose.msra.mxu0 %v396
        %489 = vmatprep.subr.mxu0 0.0
        %490 = vmatpush1.xpose.msra.mxu0 %v399
        %491 = vmatprep.subr.mxu0 0.0
        %492 = vmatpush1.xpose.msra.mxu0 %v402
        %493 = vmatprep.subr.mxu0 0.0
        %494 = vmatpush1.xpose.msra.mxu0 %v405
        %495 = vmatprep.subr.mxu0 0.0
        %496 = vmatpush1.xpose.msra.mxu0 %v408
        %497 = vmatprep.subr.mxu0 0.0
        %498 = vmatpush1.xpose.msra.mxu0 %v411
        %499 = vmatprep.subr.mxu0 0.0
        %500 = vmatpush1.xpose.msra.mxu0 %v414
        %501 = vmatprep.subr.mxu0 0.0
        %502 = vmatpush1.xpose.msra.mxu0 %v417
        %503 = vmatprep.subr.mxu0 0.0
        %504 = vmatpush1.xpose.msra.mxu0 %v420
        %505 = vmatprep.subr.mxu0 0.0
        %506 = vmatpush1.xpose.msra.mxu0 %v423
        %507 = vmatprep.subr.mxu0 0.0
        %508 = vmatpush1.xpose.msra.mxu0 %v426
        %509 = vmatprep.subr.mxu0 0.0
        %510 = vmatpush1.xpose.msra.mxu0 %v429
        %511 = vmatprep.subr.mxu0 0.0
        %512 = vmatpush1.xpose.msra.mxu0 %v432
        %513 = vmatprep.subr.mxu0 0.0
        %514 = vmatpush1.xpose.msra.mxu0 %v435
        %515 = vmatprep.subr.mxu0 0.0
        %516 = vmatpush1.xpose.msra.mxu0 %v438
        %517 = vmatprep.subr.mxu0 0.0
        %518 = vmatpush1.xpose.msra.mxu0 %v441
        %519 = vmatprep.subr.mxu0 0.0
        %520 = vmatpush1.xpose.msra.mxu0 %v444
        %521 = vmatprep.subr.mxu0 0.0
        %522 = vmatpush1.xpose.msra.mxu0 %v447
        %523 = vmatprep.subr.mxu0 0.0
        %524 = vmatpush1.xpose.msra.mxu0 %v450
        %525 = vmatprep.subr.mxu0 0.0
        %526 = vmatpush1.xpose.msra.mxu0 %v453
        %527 = vmatprep.subr.mxu0 0.0
        %528 = vmatpush1.xpose.msra.mxu0 %v456
        %529 = vmatprep.subr.mxu0 0.0
        %530 = vmatpush1.xpose.msra.mxu0 %v459
        %531 = vmatprep.subr.mxu0 0.0
        %532 = vmatpush1.xpose.msra.mxu0 %v462
        %533 = vmatprep.subr.mxu0 0.0
        %534 = vmatpush1.xpose.msra.mxu0 %v465
        %535 = vmatprep.subr.mxu0 0.0
        %536 = vmatpush1.xpose.msra.mxu0 %v468
        %537 = vmatprep.subr.mxu0 0.0
        %538 = vmatpush1.xpose.msra.mxu0 %v471
        %539 = vmatprep.subr.mxu0 0.0
        %540 = vmatpush1.xpose.msra.mxu0 %v474
        %541 = vmatprep.subr.mxu0 0.0
        %542 = vmatpush1.xpose.msra.mxu0 %v477
        %543 = vmatprep.mubr.f32.mxu0 0.0
        %544 = vmatmul.mubr.f32.gmra.mrb[0].mxu0 %v381
        %v545 = vpop.f32.mrb[0].mxu0
        %v546 = vadd.f32 %v376, %v545
        %v547 = vpop.f32.mrb[0].mxu0
        %v548 = vadd.f32 %v378, %v547
        %549 = vdwg.mxu0
        %v550 = vld [vmem:[%s141 + $0x2] sm:$0xff]
        %v551 = vld [vmem:[%s141 + $0xa] sm:$0xff]
        %v552 = vld [vmem:[%s141 + $0x1a] sm:$0xff]
        %v553 = vld [vmem:[%s141 + $0x22] sm:$0xff]
        %v554 = vld [vmem:[%s141 + $0x32] sm:$0xff]
        %v555 = vld [vmem:[%s141 + $0x3a] sm:$0xff]
        %v556 = vld [vmem:[%s141 + $0x4a] sm:$0xff]
        %v557 = vld [vmem:[%s141 + $0x52] sm:$0xff]
        %v558 = vld [vmem:[%s141 + $0x62] sm:$0xff]
        %v559 = vld [vmem:[%s141 + $0x6a] sm:$0xff]
        %v560 = vld [vmem:[%s141 + $0x7a] sm:$0xff]
        %v561 = vld [vmem:[%s141 + $0x82] sm:$0xff]
        %v562 = vld [vmem:[%s141 + $0x92] sm:$0xff]
        %v563 = vld [vmem:[%s141 + $0x9a] sm:$0xff]
        %v564 = vld [vmem:[%s141 + $0xaa] sm:$0xff]
        %v565 = vld [vmem:[%s141 + $0xb2] sm:$0xff]
        %v566 = vld [vmem:[%s141 + $0xc2] sm:$0xff]
        %v567 = vld [vmem:[%s141 + $0xca] sm:$0xff]
        %v568 = vld [vmem:[%s141 + $0xda] sm:$0xff]
        %v569 = vld [vmem:[%s141 + $0xe2] sm:$0xff]
        %v570 = vld [vmem:[%s141 + $0xf2] sm:$0xff]
        %v571 = vld [vmem:[%s141 + $0xfa] sm:$0xff]
        %v572 = vld [vmem:[%s141 + $0x10a] sm:$0xff]
        %v573 = vld [vmem:[%s141 + $0x112] sm:$0xff]
        %v574 = vld [vmem:[%s141 + $0x122] sm:$0xff]
        %v575 = vld [vmem:[%s141 + $0x12a] sm:$0xff]
        %v576 = vld [vmem:[%s141 + $0x13a] sm:$0xff]
        %v577 = vld [vmem:[%s141 + $0x142] sm:$0xff]
        %v578 = vld [vmem:[%s141 + $0x152] sm:$0xff]
        %v579 = vld [vmem:[%s141 + $0x15a] sm:$0xff]
        %v580 = vld [vmem:[%s141 + $0x16a] sm:$0xff]
        %v581 = vld [vmem:[%s141 + $0x172] sm:$0xff]
        %s582 = scalar_lea.vmem %s1, 16
        %v583 = vld [vmem:[%s582] sm:$0xff]
        %v585 = vsel %vm209, %v583, 0
        %v588 = vsel %vm209, %v550, 0
        %v591 = vsel %vm209, %v551, 0
        %v594 = vsel %vm209, %v552, 0
        %v597 = vsel %vm209, %v553, 0
        %v600 = vsel %vm209, %v554, 0
        %v603 = vsel %vm209, %v555, 0
        %v606 = vsel %vm209, %v556, 0
        %v609 = vsel %vm209, %v557, 0
        %v612 = vsel %vm209, %v558, 0
        %v615 = vsel %vm209, %v559, 0
        %v618 = vsel %vm209, %v560, 0
        %v621 = vsel %vm209, %v561, 0
        %v624 = vsel %vm209, %v562, 0
        %v627 = vsel %vm209, %v563, 0
        %v630 = vsel %vm209, %v564, 0
        %v633 = vsel %vm209, %v565, 0
        %v636 = vsel %vm209, %v566, 0
        %v639 = vsel %vm209, %v567, 0
        %v642 = vsel %vm209, %v568, 0
        %v645 = vsel %vm209, %v569, 0
        %v648 = vsel %vm209, %v570, 0
        %v651 = vsel %vm209, %v571, 0
        %v654 = vsel %vm209, %v572, 0
        %v657 = vsel %vm209, %v573, 0
        %v660 = vsel %vm209, %v574, 0
        %v663 = vsel %vm209, %v575, 0
        %v666 = vsel %vm209, %v576, 0
        %v669 = vsel %vm209, %v577, 0
        %v672 = vsel %vm209, %v578, 0
        %v675 = vsel %vm209, %v579, 0
        %v678 = vsel %vm209, %v580, 0
        %v681 = vsel %vm209, %v581, 0
        %683 = vmatprep.subr.mxu0 0.0
        %684 = vmatpush1.xpose.msra.mxu0 %v588
        %685 = vmatprep.subr.mxu0 0.0
        %686 = vmatpush1.xpose.msra.mxu0 %v591
        %687 = vmatprep.subr.mxu0 0.0
        %688 = vmatpush1.xpose.msra.mxu0 %v594
        %689 = vmatprep.subr.mxu0 0.0
        %690 = vmatpush1.xpose.msra.mxu0 %v597
        %691 = vmatprep.subr.mxu0 0.0
        %692 = vmatpush1.xpose.msra.mxu0 %v600
        %693 = vmatprep.subr.mxu0 0.0
        %694 = vmatpush1.xpose.msra.mxu0 %v603
        %695 = vmatprep.subr.mxu0 0.0
        %696 = vmatpush1.xpose.msra.mxu0 %v606
        %697 = vmatprep.subr.mxu0 0.0
        %698 = vmatpush1.xpose.msra.mxu0 %v609
        %699 = vmatprep.subr.mxu0 0.0
        %700 = vmatpush1.xpose.msra.mxu0 %v612
        %701 = vmatprep.subr.mxu0 0.0
        %702 = vmatpush1.xpose.msra.mxu0 %v615
        %703 = vmatprep.subr.mxu0 0.0
        %704 = vmatpush1.xpose.msra.mxu0 %v618
        %705 = vmatprep.subr.mxu0 0.0
        %706 = vmatpush1.xpose.msra.mxu0 %v621
        %707 = vmatprep.subr.mxu0 0.0
        %708 = vmatpush1.xpose.msra.mxu0 %v624
        %709 = vmatprep.subr.mxu0 0.0
        %710 = vmatpush1.xpose.msra.mxu0 %v627
        %711 = vmatprep.subr.mxu0 0.0
        %712 = vmatpush1.xpose.msra.mxu0 %v630
        %713 = vmatprep.subr.mxu0 0.0
        %714 = vmatpush1.xpose.msra.mxu0 %v633
        %715 = vmatprep.subr.mxu0 0.0
        %716 = vmatpush1.xpose.msra.mxu0 %v636
        %717 = vmatprep.subr.mxu0 0.0
        %718 = vmatpush1.xpose.msra.mxu0 %v639
        %719 = vmatprep.subr.mxu0 0.0
        %720 = vmatpush1.xpose.msra.mxu0 %v642
        %721 = vmatprep.subr.mxu0 0.0
        %722 = vmatpush1.xpose.msra.mxu0 %v645
        %723 = vmatprep.subr.mxu0 0.0
        %724 = vmatpush1.xpose.msra.mxu0 %v648
        %725 = vmatprep.subr.mxu0 0.0
        %726 = vmatpush1.xpose.msra.mxu0 %v651
        %727 = vmatprep.subr.mxu0 0.0
        %728 = vmatpush1.xpose.msra.mxu0 %v654
        %729 = vmatprep.subr.mxu0 0.0
        %730 = vmatpush1.xpose.msra.mxu0 %v657
        %731 = vmatprep.subr.mxu0 0.0
        %732 = vmatpush1.xpose.msra.mxu0 %v660
        %733 = vmatprep.subr.mxu0 0.0
        %734 = vmatpush1.xpose.msra.mxu0 %v663
        %735 = vmatprep.subr.mxu0 0.0
        %736 = vmatpush1.xpose.msra.mxu0 %v666
        %737 = vmatprep.subr.mxu0 0.0
        %738 = vmatpush1.xpose.msra.mxu0 %v669
        %739 = vmatprep.subr.mxu0 0.0
        %740 = vmatpush1.xpose.msra.mxu0 %v672
        %741 = vmatprep.subr.mxu0 0.0
        %742 = vmatpush1.xpose.msra.mxu0 %v675
        %743 = vmatprep.subr.mxu0 0.0
        %744 = vmatpush1.xpose.msra.mxu0 %v678
        %745 = vmatprep.subr.mxu0 0.0
        %746 = vmatpush1.xpose.msra.mxu0 %v681
        %747 = vmatprep.mubr.f32.mxu0 0.0
        %748 = vmatmul.mubr.f32.gmra.mrb[0].mxu0 %v585
        %v749 = vpop.f32.mrb[0].mxu0
        %v750 = vadd.f32 0.0, %v749
        %v751 = vpop.f32.mrb[0].mxu0
        %v752 = vadd.f32 0.0, %v751
        %753 = vdwg.mxu0
        %v754 = vadd.f32 %v546, %v750
        %v755 = vadd.f32 %v548, %v752
        %s756 = scalar_lea.vmem %s141, 24
        %v757 = vld [vmem:[%s756] sm:$0xff]
        %v758 = vld [vmem:[%s756 + $0x8] sm:$0xff]
        %v759 = vld [vmem:[%s756 + $0x18] sm:$0xff]
        %v760 = vld [vmem:[%s756 + $0x20] sm:$0xff]
        %v761 = vld [vmem:[%s756 + $0x30] sm:$0xff]
        %v762 = vld [vmem:[%s756 + $0x38] sm:$0xff]
        %v763 = vld [vmem:[%s756 + $0x48] sm:$0xff]
        %v764 = vld [vmem:[%s756 + $0x50] sm:$0xff]
        %v765 = vld [vmem:[%s756 + $0x60] sm:$0xff]
        %v766 = vld [vmem:[%s756 + $0x68] sm:$0xff]
        %v767 = vld [vmem:[%s756 + $0x78] sm:$0xff]
        %v768 = vld [vmem:[%s756 + $0x80] sm:$0xff]
        %v769 = vld [vmem:[%s756 + $0x90] sm:$0xff]
        %v770 = vld [vmem:[%s756 + $0x98] sm:$0xff]
        %v771 = vld [vmem:[%s756 + $0xa8] sm:$0xff]
        %v772 = vld [vmem:[%s756 + $0xb0] sm:$0xff]
        %v773 = vld [vmem:[%s756 + $0xc0] sm:$0xff]
        %v774 = vld [vmem:[%s756 + $0xc8] sm:$0xff]
        %v775 = vld [vmem:[%s756 + $0xd8] sm:$0xff]
        %v776 = vld [vmem:[%s756 + $0xe0] sm:$0xff]
        %v777 = vld [vmem:[%s756 + $0xf0] sm:$0xff]
        %v778 = vld [vmem:[%s756 + $0xf8] sm:$0xff]
        %v779 = vld [vmem:[%s756 + $0x108] sm:$0xff]
        %v780 = vld [vmem:[%s756 + $0x110] sm:$0xff]
        %v781 = vld [vmem:[%s756 + $0x120] sm:$0xff]
        %v782 = vld [vmem:[%s756 + $0x128] sm:$0xff]
        %v783 = vld [vmem:[%s756 + $0x138] sm:$0xff]
        %v784 = vld [vmem:[%s756 + $0x140] sm:$0xff]
        %v785 = vld [vmem:[%s756 + $0x150] sm:$0xff]
        %v786 = vld [vmem:[%s756 + $0x158] sm:$0xff]
        %v787 = vld [vmem:[%s756 + $0x168] sm:$0xff]
        %v788 = vld [vmem:[%s756 + $0x170] sm:$0xff]
        %s789 = scalar_lea.vmem %s1, 24
        %v790 = vld [vmem:[%s789] sm:$0xff]
        %v792 = vsel %vm209, %v790, 0
        %v795 = vsel %vm209, %v757, 0
        %v798 = vsel %vm209, %v758, 0
        %v801 = vsel %vm209, %v759, 0
        %v804 = vsel %vm209, %v760, 0
        %v807 = vsel %vm209, %v761, 0
        %v810 = vsel %vm209, %v762, 0
        %v813 = vsel %vm209, %v763, 0
        %v816 = vsel %vm209, %v764, 0
        %v819 = vsel %vm209, %v765, 0
        %v822 = vsel %vm209, %v766, 0
        %v825 = vsel %vm209, %v767, 0
        %v828 = vsel %vm209, %v768, 0
        %v831 = vsel %vm209, %v769, 0
        %v834 = vsel %vm209, %v770, 0
        %v837 = vsel %vm209, %v771, 0
        %v840 = vsel %vm209, %v772, 0
        %v843 = vsel %vm209, %v773, 0
        %v846 = vsel %vm209, %v774, 0
        %v849 = vsel %vm209, %v775, 0
        %v852 = vsel %vm209, %v776, 0
        %v855 = vsel %vm209, %v777, 0
        %v858 = vsel %vm209, %v778, 0
        %v861 = vsel %vm209, %v779, 0
        %v864 = vsel %vm209, %v780, 0
        %v867 = vsel %vm209, %v781, 0
        %v870 = vsel %vm209, %v782, 0
        %v873 = vsel %vm209, %v783, 0
        %v876 = vsel %vm209, %v784, 0
        %v879 = vsel %vm209, %v785, 0
        %v882 = vsel %vm209, %v786, 0
        %v885 = vsel %vm209, %v787, 0
        %v888 = vsel %vm209, %v788, 0
        %890 = vmatprep.subr.mxu0 0.0
        %891 = vmatpush1.xpose.msra.mxu0 %v795
        %892 = vmatprep.subr.mxu0 0.0
        %893 = vmatpush1.xpose.msra.mxu0 %v798
        %894 = vmatprep.subr.mxu0 0.0
        %895 = vmatpush1.xpose.msra.mxu0 %v801
        %896 = vmatprep.subr.mxu0 0.0
        %897 = vmatpush1.xpose.msra.mxu0 %v804
        %898 = vmatprep.subr.mxu0 0.0
        %899 = vmatpush1.xpose.msra.mxu0 %v807
        %900 = vmatprep.subr.mxu0 0.0
        %901 = vmatpush1.xpose.msra.mxu0 %v810
        %902 = vmatprep.subr.mxu0 0.0
        %903 = vmatpush1.xpose.msra.mxu0 %v813
        %904 = vmatprep.subr.mxu0 0.0
        %905 = vmatpush1.xpose.msra.mxu0 %v816
        %906 = vmatprep.subr.mxu0 0.0
        %907 = vmatpush1.xpose.msra.mxu0 %v819
        %908 = vmatprep.subr.mxu0 0.0
        %909 = vmatpush1.xpose.msra.mxu0 %v822
        %910 = vmatprep.subr.mxu0 0.0
        %911 = vmatpush1.xpose.msra.mxu0 %v825
        %912 = vmatprep.subr.mxu0 0.0
        %913 = vmatpush1.xpose.msra.mxu0 %v828
        %914 = vmatprep.subr.mxu0 0.0
        %915 = vmatpush1.xpose.msra.mxu0 %v831
        %916 = vmatprep.subr.mxu0 0.0
        %917 = vmatpush1.xpose.msra.mxu0 %v834
        %918 = vmatprep.subr.mxu0 0.0
        %919 = vmatpush1.xpose.msra.mxu0 %v837
        %920 = vmatprep.subr.mxu0 0.0
        %921 = vmatpush1.xpose.msra.mxu0 %v840
        %922 = vmatprep.subr.mxu0 0.0
        %923 = vmatpush1.xpose.msra.mxu0 %v843
        %924 = vmatprep.subr.mxu0 0.0
        %925 = vmatpush1.xpose.msra.mxu0 %v846
        %926 = vmatprep.subr.mxu0 0.0
        %927 = vmatpush1.xpose.msra.mxu0 %v849
        %928 = vmatprep.subr.mxu0 0.0
        %929 = vmatpush1.xpose.msra.mxu0 %v852
        %930 = vmatprep.subr.mxu0 0.0
        %931 = vmatpush1.xpose.msra.mxu0 %v855
        %932 = vmatprep.subr.mxu0 0.0
        %933 = vmatpush1.xpose.msra.mxu0 %v858
        %934 = vmatprep.subr.mxu0 0.0
        %935 = vmatpush1.xpose.msra.mxu0 %v861
        %936 = vmatprep.subr.mxu0 0.0
        %937 = vmatpush1.xpose.msra.mxu0 %v864
        %938 = vmatprep.subr.mxu0 0.0
        %939 = vmatpush1.xpose.msra.mxu0 %v867
        %940 = vmatprep.subr.mxu0 0.0
        %941 = vmatpush1.xpose.msra.mxu0 %v870
        %942 = vmatprep.subr.mxu0 0.0
        %943 = vmatpush1.xpose.msra.mxu0 %v873
        %944 = vmatprep.subr.mxu0 0.0
        %945 = vmatpush1.xpose.msra.mxu0 %v876
        %946 = vmatprep.subr.mxu0 0.0
        %947 = vmatpush1.xpose.msra.mxu0 %v879
        %948 = vmatprep.subr.mxu0 0.0
        %949 = vmatpush1.xpose.msra.mxu0 %v882
        %950 = vmatprep.subr.mxu0 0.0
        %951 = vmatpush1.xpose.msra.mxu0 %v885
        %952 = vmatprep.subr.mxu0 0.0
        %953 = vmatpush1.xpose.msra.mxu0 %v888
        %954 = vmatprep.mubr.f32.mxu0 0.0
        %955 = vmatmul.mubr.f32.gmra.mrb[0].mxu0 %v792
        %v956 = vpop.f32.mrb[0].mxu0
        %v957 = vadd.f32 0.0, %v956
        %v958 = vpop.f32.mrb[0].mxu0
        %v959 = vadd.f32 0.0, %v958
        %960 = vdwg.mxu0
        %v961 = vadd.f32 %v754, %v957
        %v962 = vadd.f32 %v755, %v959
        %v963 = vld [vmem:[%s756 + $0x1] sm:$0xff]
        %v964 = vld [vmem:[%s756 + $0x9] sm:$0xff]
        %v965 = vld [vmem:[%s756 + $0x19] sm:$0xff]
        %v966 = vld [vmem:[%s756 + $0x21] sm:$0xff]
        %v967 = vld [vmem:[%s756 + $0x31] sm:$0xff]
        %v968 = vld [vmem:[%s756 + $0x39] sm:$0xff]
        %v969 = vld [vmem:[%s756 + $0x49] sm:$0xff]
        %v970 = vld [vmem:[%s756 + $0x51] sm:$0xff]
        %v971 = vld [vmem:[%s756 + $0x61] sm:$0xff]
        %v972 = vld [vmem:[%s756 + $0x69] sm:$0xff]
        %v973 = vld [vmem:[%s756 + $0x79] sm:$0xff]
        %v974 = vld [vmem:[%s756 + $0x81] sm:$0xff]
        %v975 = vld [vmem:[%s756 + $0x91] sm:$0xff]
        %v976 = vld [vmem:[%s756 + $0x99] sm:$0xff]
        %v977 = vld [vmem:[%s756 + $0xa9] sm:$0xff]
        %v978 = vld [vmem:[%s756 + $0xb1] sm:$0xff]
        %v979 = vld [vmem:[%s756 + $0xc1] sm:$0xff]
        %v980 = vld [vmem:[%s756 + $0xc9] sm:$0xff]
        %v981 = vld [vmem:[%s756 + $0xd9] sm:$0xff]
        %v982 = vld [vmem:[%s756 + $0xe1] sm:$0xff]
        %v983 = vld [vmem:[%s756 + $0xf1] sm:$0xff]
        %v984 = vld [vmem:[%s756 + $0xf9] sm:$0xff]
        %v985 = vld [vmem:[%s756 + $0x109] sm:$0xff]
        %v986 = vld [vmem:[%s756 + $0x111] sm:$0xff]
        %v987 = vld [vmem:[%s756 + $0x121] sm:$0xff]
        %v988 = vld [vmem:[%s756 + $0x129] sm:$0xff]
        %v989 = vld [vmem:[%s756 + $0x139] sm:$0xff]
        %v990 = vld [vmem:[%s756 + $0x141] sm:$0xff]
        %v991 = vld [vmem:[%s756 + $0x151] sm:$0xff]
        %v992 = vld [vmem:[%s756 + $0x159] sm:$0xff]
        %v993 = vld [vmem:[%s756 + $0x169] sm:$0xff]
        %v994 = vld [vmem:[%s756 + $0x171] sm:$0xff]
        %s995 = scalar_lea.vmem %s1, 32
        %v996 = vld [vmem:[%s995] sm:$0xff]
        %v998 = vsel %vm209, %v996, 0
        %v1001 = vsel %vm209, %v963, 0
        %v1004 = vsel %vm209, %v964, 0
        %v1007 = vsel %vm209, %v965, 0
        %v1010 = vsel %vm209, %v966, 0
        %v1013 = vsel %vm209, %v967, 0
        %v1016 = vsel %vm209, %v968, 0
        %v1019 = vsel %vm209, %v969, 0
        %v1022 = vsel %vm209, %v970, 0
        %v1025 = vsel %vm209, %v971, 0
        %v1028 = vsel %vm209, %v972, 0
        %v1031 = vsel %vm209, %v973, 0
        %v1034 = vsel %vm209, %v974, 0
        %v1037 = vsel %vm209, %v975, 0
        %v1040 = vsel %vm209, %v976, 0
        %v1043 = vsel %vm209, %v977, 0
        %v1046 = vsel %vm209, %v978, 0
        %v1049 = vsel %vm209, %v979, 0
        %v1052 = vsel %vm209, %v980, 0
        %v1055 = vsel %vm209, %v981, 0
        %v1058 = vsel %vm209, %v982, 0
        %v1061 = vsel %vm209, %v983, 0
        %v1064 = vsel %vm209, %v984, 0
        %v1067 = vsel %vm209, %v985, 0
        %v1070 = vsel %vm209, %v986, 0
        %v1073 = vsel %vm209, %v987, 0
        %v1076 = vsel %vm209, %v988, 0
        %v1079 = vsel %vm209, %v989, 0
        %v1082 = vsel %vm209, %v990, 0
        %v1085 = vsel %vm209, %v991, 0
        %v1088 = vsel %vm209, %v992, 0
        %v1091 = vsel %vm209, %v993, 0
        %v1094 = vsel %vm209, %v994, 0
        %1096 = vmatprep.subr.mxu0 0.0
        %1097 = vmatpush1.xpose.msra.mxu0 %v1001
        %1098 = vmatprep.subr.mxu0 0.0
        %1099 = vmatpush1.xpose.msra.mxu0 %v1004
        %1100 = vmatprep.subr.mxu0 0.0
        %1101 = vmatpush1.xpose.msra.mxu0 %v1007
        %1102 = vmatprep.subr.mxu0 0.0
        %1103 = vmatpush1.xpose.msra.mxu0 %v1010
        %1104 = vmatprep.subr.mxu0 0.0
        %1105 = vmatpush1.xpose.msra.mxu0 %v1013
        %1106 = vmatprep.subr.mxu0 0.0
        %1107 = vmatpush1.xpose.msra.mxu0 %v1016
        %1108 = vmatprep.subr.mxu0 0.0
        %1109 = vmatpush1.xpose.msra.mxu0 %v1019
        %1110 = vmatprep.subr.mxu0 0.0
        %1111 = vmatpush1.xpose.msra.mxu0 %v1022
        %1112 = vmatprep.subr.mxu0 0.0
        %1113 = vmatpush1.xpose.msra.mxu0 %v1025
        %1114 = vmatprep.subr.mxu0 0.0
        %1115 = vmatpush1.xpose.msra.mxu0 %v1028
        %1116 = vmatprep.subr.mxu0 0.0
        %1117 = vmatpush1.xpose.msra.mxu0 %v1031
        %1118 = vmatprep.subr.mxu0 0.0
        %1119 = vmatpush1.xpose.msra.mxu0 %v1034
        %1120 = vmatprep.subr.mxu0 0.0
        %1121 = vmatpush1.xpose.msra.mxu0 %v1037
        %1122 = vmatprep.subr.mxu0 0.0
        %1123 = vmatpush1.xpose.msra.mxu0 %v1040
        %1124 = vmatprep.subr.mxu0 0.0
        %1125 = vmatpush1.xpose.msra.mxu0 %v1043
        %1126 = vmatprep.subr.mxu0 0.0
        %1127 = vmatpush1.xpose.msra.mxu0 %v1046
        %1128 = vmatprep.subr.mxu0 0.0
        %1129 = vmatpush1.xpose.msra.mxu0 %v1049
        %1130 = vmatprep.subr.mxu0 0.0
        %1131 = vmatpush1.xpose.msra.mxu0 %v1052
        %1132 = vmatprep.subr.mxu0 0.0
        %1133 = vmatpush1.xpose.msra.mxu0 %v1055
        %1134 = vmatprep.subr.mxu0 0.0
        %1135 = vmatpush1.xpose.msra.mxu0 %v1058
        %1136 = vmatprep.subr.mxu0 0.0
        %1137 = vmatpush1.xpose.msra.mxu0 %v1061
        %1138 = vmatprep.subr.mxu0 0.0
        %1139 = vmatpush1.xpose.msra.mxu0 %v1064
        %1140 = vmatprep.subr.mxu0 0.0
        %1141 = vmatpush1.xpose.msra.mxu0 %v1067
        %1142 = vmatprep.subr.mxu0 0.0
        %1143 = vmatpush1.xpose.msra.mxu0 %v1070
        %1144 = vmatprep.subr.mxu0 0.0
        %1145 = vmatpush1.xpose.msra.mxu0 %v1073
        %1146 = vmatprep.subr.mxu0 0.0
        %1147 = vmatpush1.xpose.msra.mxu0 %v1076
        %1148 = vmatprep.subr.mxu0 0.0
        %1149 = vmatpush1.xpose.msra.mxu0 %v1079
        %1150 = vmatprep.subr.mxu0 0.0
        %1151 = vmatpush1.xpose.msra.mxu0 %v1082
        %1152 = vmatprep.subr.mxu0 0.0
        %1153 = vmatpush1.xpose.msra.mxu0 %v1085
        %1154 = vmatprep.subr.mxu0 0.0
        %1155 = vmatpush1.xpose.msra.mxu0 %v1088
        %1156 = vmatprep.subr.mxu0 0.0
        %1157 = vmatpush1.xpose.msra.mxu0 %v1091
        %1158 = vmatprep.subr.mxu0 0.0
        %1159 = vmatpush1.xpose.msra.mxu0 %v1094
        %1160 = vmatprep.mubr.f32.mxu0 0.0
        %1161 = vmatmul.mubr.f32.gmra.mrb[0].mxu0 %v998
        %v1162 = vpop.f32.mrb[0].mxu0
        %v1163 = vadd.f32 0.0, %v1162
        %v1164 = vpop.f32.mrb[0].mxu0
        %v1165 = vadd.f32 0.0, %v1164
        %1166 = vdwg.mxu0
        %v1167 = vadd.f32 %v961, %v1163
        %v1168 = vadd.f32 %v962, %v1165
        %v1169 = vld [vmem:[%s756 + $0x2] sm:$0xff]
        %v1170 = vld [vmem:[%s756 + $0xa] sm:$0xff]
        %v1171 = vld [vmem:[%s756 + $0x1a] sm:$0xff]
        %v1172 = vld [vmem:[%s756 + $0x22] sm:$0xff]
        %v1173 = vld [vmem:[%s756 + $0x32] sm:$0xff]
        %v1174 = vld [vmem:[%s756 + $0x3a] sm:$0xff]
        %v1175 = vld [vmem:[%s756 + $0x4a] sm:$0xff]
        %v1176 = vld [vmem:[%s756 + $0x52] sm:$0xff]
        %v1177 = vld [vmem:[%s756 + $0x62] sm:$0xff]
        %v1178 = vld [vmem:[%s756 + $0x6a] sm:$0xff]
        %v1179 = vld [vmem:[%s756 + $0x7a] sm:$0xff]
        %v1180 = vld [vmem:[%s756 + $0x82] sm:$0xff]
        %v1181 = vld [vmem:[%s756 + $0x92] sm:$0xff]
        %v1182 = vld [vmem:[%s756 + $0x9a] sm:$0xff]
        %v1183 = vld [vmem:[%s756 + $0xaa] sm:$0xff]
        %v1184 = vld [vmem:[%s756 + $0xb2] sm:$0xff]
        %v1185 = vld [vmem:[%s756 + $0xc2] sm:$0xff]
        %v1186 = vld [vmem:[%s756 + $0xca] sm:$0xff]
        %v1187 = vld [vmem:[%s756 + $0xda] sm:$0xff]
        %v1188 = vld [vmem:[%s756 + $0xe2] sm:$0xff]
        %v1189 = vld [vmem:[%s756 + $0xf2] sm:$0xff]
        %v1190 = vld [vmem:[%s756 + $0xfa] sm:$0xff]
        %v1191 = vld [vmem:[%s756 + $0x10a] sm:$0xff]
        %v1192 = vld [vmem:[%s756 + $0x112] sm:$0xff]
        %v1193 = vld [vmem:[%s756 + $0x122] sm:$0xff]
        %v1194 = vld [vmem:[%s756 + $0x12a] sm:$0xff]
        %v1195 = vld [vmem:[%s756 + $0x13a] sm:$0xff]
        %v1196 = vld [vmem:[%s756 + $0x142] sm:$0xff]
        %v1197 = vld [vmem:[%s756 + $0x152] sm:$0xff]
        %v1198 = vld [vmem:[%s756 + $0x15a] sm:$0xff]
        %v1199 = vld [vmem:[%s756 + $0x16a] sm:$0xff]
        %v1200 = vld [vmem:[%s756 + $0x172] sm:$0xff]
        %s1201 = scalar_lea.vmem %s1, 40
        %v1202 = vld [vmem:[%s1201] sm:$0xff]
        %v1204 = vsel %vm209, %v1202, 0
        %v1207 = vsel %vm209, %v1169, 0
        %v1210 = vsel %vm209, %v1170, 0
        %v1213 = vsel %vm209, %v1171, 0
        %v1216 = vsel %vm209, %v1172, 0
        %v1219 = vsel %vm209, %v1173, 0
        %v1222 = vsel %vm209, %v1174, 0
        %v1225 = vsel %vm209, %v1175, 0
        %v1228 = vsel %vm209, %v1176, 0
        %v1231 = vsel %vm209, %v1177, 0
        %v1234 = vsel %vm209, %v1178, 0
        %v1237 = vsel %vm209, %v1179, 0
        %v1240 = vsel %vm209, %v1180, 0
        %v1243 = vsel %vm209, %v1181, 0
        %v1246 = vsel %vm209, %v1182, 0
        %v1249 = vsel %vm209, %v1183, 0
        %v1252 = vsel %vm209, %v1184, 0
        %v1255 = vsel %vm209, %v1185, 0
        %v1258 = vsel %vm209, %v1186, 0
        %v1261 = vsel %vm209, %v1187, 0
        %v1264 = vsel %vm209, %v1188, 0
        %v1267 = vsel %vm209, %v1189, 0
        %v1270 = vsel %vm209, %v1190, 0
        %v1273 = vsel %vm209, %v1191, 0
        %v1276 = vsel %vm209, %v1192, 0
        %v1279 = vsel %vm209, %v1193, 0
        %v1282 = vsel %vm209, %v1194, 0
        %v1285 = vsel %vm209, %v1195, 0
        %v1288 = vsel %vm209, %v1196, 0
        %v1291 = vsel %vm209, %v1197, 0
        %v1294 = vsel %vm209, %v1198, 0
        %v1297 = vsel %vm209, %v1199, 0
        %v1300 = vsel %vm209, %v1200, 0
        %1302 = vmatprep.subr.mxu0 0.0
        %1303 = vmatpush1.xpose.msra.mxu0 %v1207
        %1304 = vmatprep.subr.mxu0 0.0
        %1305 = vmatpush1.xpose.msra.mxu0 %v1210
        %1306 = vmatprep.subr.mxu0 0.0
        %1307 = vmatpush1.xpose.msra.mxu0 %v1213
        %1308 = vmatprep.subr.mxu0 0.0
        %1309 = vmatpush1.xpose.msra.mxu0 %v1216
        %1310 = vmatprep.subr.mxu0 0.0
        %1311 = vmatpush1.xpose.msra.mxu0 %v1219
        %1312 = vmatprep.subr.mxu0 0.0
        %1313 = vmatpush1.xpose.msra.mxu0 %v1222
        %1314 = vmatprep.subr.mxu0 0.0
        %1315 = vmatpush1.xpose.msra.mxu0 %v1225
        %1316 = vmatprep.subr.mxu0 0.0
        %1317 = vmatpush1.xpose.msra.mxu0 %v1228
        %1318 = vmatprep.subr.mxu0 0.0
        %1319 = vmatpush1.xpose.msra.mxu0 %v1231
        %1320 = vmatprep.subr.mxu0 0.0
        %1321 = vmatpush1.xpose.msra.mxu0 %v1234
        %1322 = vmatprep.subr.mxu0 0.0
        %1323 = vmatpush1.xpose.msra.mxu0 %v1237
        %1324 = vmatprep.subr.mxu0 0.0
        %1325 = vmatpush1.xpose.msra.mxu0 %v1240
        %1326 = vmatprep.subr.mxu0 0.0
        %1327 = vmatpush1.xpose.msra.mxu0 %v1243
        %1328 = vmatprep.subr.mxu0 0.0
        %1329 = vmatpush1.xpose.msra.mxu0 %v1246
        %1330 = vmatprep.subr.mxu0 0.0
        %1331 = vmatpush1.xpose.msra.mxu0 %v1249
        %1332 = vmatprep.subr.mxu0 0.0
        %1333 = vmatpush1.xpose.msra.mxu0 %v1252
        %1334 = vmatprep.subr.mxu0 0.0
        %1335 = vmatpush1.xpose.msra.mxu0 %v1255
        %1336 = vmatprep.subr.mxu0 0.0
        %1337 = vmatpush1.xpose.msra.mxu0 %v1258
        %1338 = vmatprep.subr.mxu0 0.0
        %1339 = vmatpush1.xpose.msra.mxu0 %v1261
        %1340 = vmatprep.subr.mxu0 0.0
        %1341 = vmatpush1.xpose.msra.mxu0 %v1264
        %1342 = vmatprep.subr.mxu0 0.0
        %1343 = vmatpush1.xpose.msra.mxu0 %v1267
        %1344 = vmatprep.subr.mxu0 0.0
        %1345 = vmatpush1.xpose.msra.mxu0 %v1270
        %1346 = vmatprep.subr.mxu0 0.0
        %1347 = vmatpush1.xpose.msra.mxu0 %v1273
        %1348 = vmatprep.subr.mxu0 0.0
        %1349 = vmatpush1.xpose.msra.mxu0 %v1276
        %1350 = vmatprep.subr.mxu0 0.0
        %1351 = vmatpush1.xpose.msra.mxu0 %v1279
        %1352 = vmatprep.subr.mxu0 0.0
        %1353 = vmatpush1.xpose.msra.mxu0 %v1282
        %1354 = vmatprep.subr.mxu0 0.0
        %1355 = vmatpush1.xpose.msra.mxu0 %v1285
        %1356 = vmatprep.subr.mxu0 0.0
        %1357 = vmatpush1.xpose.msra.mxu0 %v1288
        %1358 = vmatprep.subr.mxu0 0.0
        %1359 = vmatpush1.xpose.msra.mxu0 %v1291
        %1360 = vmatprep.subr.mxu0 0.0
        %1361 = vmatpush1.xpose.msra.mxu0 %v1294
        %1362 = vmatprep.subr.mxu0 0.0
        %1363 = vmatpush1.xpose.msra.mxu0 %v1297
        %1364 = vmatprep.subr.mxu0 0.0
        %1365 = vmatpush1.xpose.msra.mxu0 %v1300
        %1366 = vmatprep.mubr.f32.mxu0 0.0
        %1367 = vmatmul.mubr.f32.gmra.mrb[0].mxu0 %v1204
        %v1368 = vpop.f32.mrb[0].mxu0
        %v1369 = vadd.f32 0.0, %v1368
        %v1370 = vpop.f32.mrb[0].mxu0
        %v1371 = vadd.f32 0.0, %v1370
        %1372 = vdwg.mxu0
        %v1373 = vadd.f32 %v1167, %v1369
        %v1374 = vadd.f32 %v1168, %v1371
        %s1375 = scalar_lea.vmem %s141, 48
        %v1376 = vld [vmem:[%s1375] sm:$0xff]
        %v1377 = vld [vmem:[%s1375 + $0x8] sm:$0xff]
        %v1378 = vld [vmem:[%s1375 + $0x18] sm:$0xff]
        %v1379 = vld [vmem:[%s1375 + $0x20] sm:$0xff]
        %v1380 = vld [vmem:[%s1375 + $0x30] sm:$0xff]
        %v1381 = vld [vmem:[%s1375 + $0x38] sm:$0xff]
        %v1382 = vld [vmem:[%s1375 + $0x48] sm:$0xff]
        %v1383 = vld [vmem:[%s1375 + $0x50] sm:$0xff]
        %v1384 = vld [vmem:[%s1375 + $0x60] sm:$0xff]
        %v1385 = vld [vmem:[%s1375 + $0x68] sm:$0xff]
        %v1386 = vld [vmem:[%s1375 + $0x78] sm:$0xff]
        %v1387 = vld [vmem:[%s1375 + $0x80] sm:$0xff]
        %v1388 = vld [vmem:[%s1375 + $0x90] sm:$0xff]
        %v1389 = vld [vmem:[%s1375 + $0x98] sm:$0xff]
        %v1390 = vld [vmem:[%s1375 + $0xa8] sm:$0xff]
        %v1391 = vld [vmem:[%s1375 + $0xb0] sm:$0xff]
        %v1392 = vld [vmem:[%s1375 + $0xc0] sm:$0xff]
        %v1393 = vld [vmem:[%s1375 + $0xc8] sm:$0xff]
        %v1394 = vld [vmem:[%s1375 + $0xd8] sm:$0xff]
        %v1395 = vld [vmem:[%s1375 + $0xe0] sm:$0xff]
        %v1396 = vld [vmem:[%s1375 + $0xf0] sm:$0xff]
        %v1397 = vld [vmem:[%s1375 + $0xf8] sm:$0xff]
        %v1398 = vld [vmem:[%s1375 + $0x108] sm:$0xff]
        %v1399 = vld [vmem:[%s1375 + $0x110] sm:$0xff]
        %v1400 = vld [vmem:[%s1375 + $0x120] sm:$0xff]
        %v1401 = vld [vmem:[%s1375 + $0x128] sm:$0xff]
        %v1402 = vld [vmem:[%s1375 + $0x138] sm:$0xff]
        %v1403 = vld [vmem:[%s1375 + $0x140] sm:$0xff]
        %v1404 = vld [vmem:[%s1375 + $0x150] sm:$0xff]
        %v1405 = vld [vmem:[%s1375 + $0x158] sm:$0xff]
        %v1406 = vld [vmem:[%s1375 + $0x168] sm:$0xff]
        %v1407 = vld [vmem:[%s1375 + $0x170] sm:$0xff]
        %s1408 = scalar_lea.vmem %s1, 48
        %v1409 = vld [vmem:[%s1408] sm:$0xff]
        %v1411 = vsel %vm209, %v1409, 0
        %v1414 = vsel %vm209, %v1376, 0
        %v1417 = vsel %vm209, %v1377, 0
        %v1420 = vsel %vm209, %v1378, 0
        %v1423 = vsel %vm209, %v1379, 0
        %v1426 = vsel %vm209, %v1380, 0
        %v1429 = vsel %vm209, %v1381, 0
        %v1432 = vsel %vm209, %v1382, 0
        %v1435 = vsel %vm209, %v1383, 0
        %v1438 = vsel %vm209, %v1384, 0
        %v1441 = vsel %vm209, %v1385, 0
        %v1444 = vsel %vm209, %v1386, 0
        %v1447 = vsel %vm209, %v1387, 0
        %v1450 = vsel %vm209, %v1388, 0
        %v1453 = vsel %vm209, %v1389, 0
        %v1456 = vsel %vm209, %v1390, 0
        %v1459 = vsel %vm209, %v1391, 0
        %v1462 = vsel %vm209, %v1392, 0
        %v1465 = vsel %vm209, %v1393, 0
        %v1468 = vsel %vm209, %v1394, 0
        %v1471 = vsel %vm209, %v1395, 0
        %v1474 = vsel %vm209, %v1396, 0
        %v1477 = vsel %vm209, %v1397, 0
        %v1480 = vsel %vm209, %v1398, 0
        %v1483 = vsel %vm209, %v1399, 0
        %v1486 = vsel %vm209, %v1400, 0
        %v1489 = vsel %vm209, %v1401, 0
        %v1492 = vsel %vm209, %v1402, 0
        %v1495 = vsel %vm209, %v1403, 0
        %v1498 = vsel %vm209, %v1404, 0
        %v1501 = vsel %vm209, %v1405, 0
        %v1504 = vsel %vm209, %v1406, 0
        %v1507 = vsel %vm209, %v1407, 0
        %1509 = vmatprep.subr.mxu0 0.0
        %1510 = vmatpush1.xpose.msra.mxu0 %v1414
        %1511 = vmatprep.subr.mxu0 0.0
        %1512 = vmatpush1.xpose.msra.mxu0 %v1417
        %1513 = vmatprep.subr.mxu0 0.0
        %1514 = vmatpush1.xpose.msra.mxu0 %v1420
        %1515 = vmatprep.subr.mxu0 0.0
        %1516 = vmatpush1.xpose.msra.mxu0 %v1423
        %1517 = vmatprep.subr.mxu0 0.0
        %1518 = vmatpush1.xpose.msra.mxu0 %v1426
        %1519 = vmatprep.subr.mxu0 0.0
        %1520 = vmatpush1.xpose.msra.mxu0 %v1429
        %1521 = vmatprep.subr.mxu0 0.0
        %1522 = vmatpush1.xpose.msra.mxu0 %v1432
        %1523 = vmatprep.subr.mxu0 0.0
        %1524 = vmatpush1.xpose.msra.mxu0 %v1435
        %1525 = vmatprep.subr.mxu0 0.0
        %1526 = vmatpush1.xpose.msra.mxu0 %v1438
        %1527 = vmatprep.subr.mxu0 0.0
        %1528 = vmatpush1.xpose.msra.mxu0 %v1441
        %1529 = vmatprep.subr.mxu0 0.0
        %1530 = vmatpush1.xpose.msra.mxu0 %v1444
        %1531 = vmatprep.subr.mxu0 0.0
        %1532 = vmatpush1.xpose.msra.mxu0 %v1447
        %1533 = vmatprep.subr.mxu0 0.0
        %1534 = vmatpush1.xpose.msra.mxu0 %v1450
        %1535 = vmatprep.subr.mxu0 0.0
        %1536 = vmatpush1.xpose.msra.mxu0 %v1453
        %1537 = vmatprep.subr.mxu0 0.0
        %1538 = vmatpush1.xpose.msra.mxu0 %v1456
        %1539 = vmatprep.subr.mxu0 0.0
        %1540 = vmatpush1.xpose.msra.mxu0 %v1459
        %1541 = vmatprep.subr.mxu0 0.0
        %1542 = vmatpush1.xpose.msra.mxu0 %v1462
        %1543 = vmatprep.subr.mxu0 0.0
        %1544 = vmatpush1.xpose.msra.mxu0 %v1465
        %1545 = vmatprep.subr.mxu0 0.0
        %1546 = vmatpush1.xpose.msra.mxu0 %v1468
        %1547 = vmatprep.subr.mxu0 0.0
        %1548 = vmatpush1.xpose.msra.mxu0 %v1471
        %1549 = vmatprep.subr.mxu0 0.0
        %1550 = vmatpush1.xpose.msra.mxu0 %v1474
        %1551 = vmatprep.subr.mxu0 0.0
        %1552 = vmatpush1.xpose.msra.mxu0 %v1477
        %1553 = vmatprep.subr.mxu0 0.0
        %1554 = vmatpush1.xpose.msra.mxu0 %v1480
        %1555 = vmatprep.subr.mxu0 0.0
        %1556 = vmatpush1.xpose.msra.mxu0 %v1483
        %1557 = vmatprep.subr.mxu0 0.0
        %1558 = vmatpush1.xpose.msra.mxu0 %v1486
        %1559 = vmatprep.subr.mxu0 0.0
        %1560 = vmatpush1.xpose.msra.mxu0 %v1489
        %1561 = vmatprep.subr.mxu0 0.0
        %1562 = vmatpush1.xpose.msra.mxu0 %v1492
        %1563 = vmatprep.subr.mxu0 0.0
        %1564 = vmatpush1.xpose.msra.mxu0 %v1495
        %1565 = vmatprep.subr.mxu0 0.0
        %1566 = vmatpush1.xpose.msra.mxu0 %v1498
        %1567 = vmatprep.subr.mxu0 0.0
        %1568 = vmatpush1.xpose.msra.mxu0 %v1501
        %1569 = vmatprep.subr.mxu0 0.0
        %1570 = vmatpush1.xpose.msra.mxu0 %v1504
        %1571 = vmatprep.subr.mxu0 0.0
        %1572 = vmatpush1.xpose.msra.mxu0 %v1507
        %1573 = vmatprep.mubr.f32.mxu0 0.0
        %1574 = vmatmul.mubr.f32.gmra.mrb[0].mxu0 %v1411
        %v1575 = vpop.f32.mrb[0].mxu0
        %v1576 = vadd.f32 0.0, %v1575
        %v1577 = vpop.f32.mrb[0].mxu0
        %v1578 = vadd.f32 0.0, %v1577
        %1579 = vdwg.mxu0
        %v1580 = vadd.f32 %v1373, %v1576
        %v1581 = vadd.f32 %v1374, %v1578
        %v1582 = vld [vmem:[%s1375 + $0x1] sm:$0xff]
        %v1583 = vld [vmem:[%s1375 + $0x9] sm:$0xff]
        %v1584 = vld [vmem:[%s1375 + $0x19] sm:$0xff]
        %v1585 = vld [vmem:[%s1375 + $0x21] sm:$0xff]
        %v1586 = vld [vmem:[%s1375 + $0x31] sm:$0xff]
        %v1587 = vld [vmem:[%s1375 + $0x39] sm:$0xff]
        %v1588 = vld [vmem:[%s1375 + $0x49] sm:$0xff]
        %v1589 = vld [vmem:[%s1375 + $0x51] sm:$0xff]
        %v1590 = vld [vmem:[%s1375 + $0x61] sm:$0xff]
        %v1591 = vld [vmem:[%s1375 + $0x69] sm:$0xff]
        %v1592 = vld [vmem:[%s1375 + $0x79] sm:$0xff]
        %v1593 = vld [vmem:[%s1375 + $0x81] sm:$0xff]
        %v1594 = vld [vmem:[%s1375 + $0x91] sm:$0xff]
        %v1595 = vld [vmem:[%s1375 + $0x99] sm:$0xff]
        %v1596 = vld [vmem:[%s1375 + $0xa9] sm:$0xff]
        %v1597 = vld [vmem:[%s1375 + $0xb1] sm:$0xff]
        %v1598 = vld [vmem:[%s1375 + $0xc1] sm:$0xff]
        %v1599 = vld [vmem:[%s1375 + $0xc9] sm:$0xff]
        %v1600 = vld [vmem:[%s1375 + $0xd9] sm:$0xff]
        %v1601 = vld [vmem:[%s1375 + $0xe1] sm:$0xff]
        %v1602 = vld [vmem:[%s1375 + $0xf1] sm:$0xff]
        %v1603 = vld [vmem:[%s1375 + $0xf9] sm:$0xff]
        %v1604 = vld [vmem:[%s1375 + $0x109] sm:$0xff]
        %v1605 = vld [vmem:[%s1375 + $0x111] sm:$0xff]
        %v1606 = vld [vmem:[%s1375 + $0x121] sm:$0xff]
        %v1607 = vld [vmem:[%s1375 + $0x129] sm:$0xff]
        %v1608 = vld [vmem:[%s1375 + $0x139] sm:$0xff]
        %v1609 = vld [vmem:[%s1375 + $0x141] sm:$0xff]
        %v1610 = vld [vmem:[%s1375 + $0x151] sm:$0xff]
        %v1611 = vld [vmem:[%s1375 + $0x159] sm:$0xff]
        %v1612 = vld [vmem:[%s1375 + $0x169] sm:$0xff]
        %v1613 = vld [vmem:[%s1375 + $0x171] sm:$0xff]
        %s1614 = scalar_lea.vmem %s1, 56
        %v1615 = vld [vmem:[%s1614] sm:$0xff]
        %v1617 = vsel %vm209, %v1615, 0
        %v1620 = vsel %vm209, %v1582, 0
        %v1623 = vsel %vm209, %v1583, 0
        %v1626 = vsel %vm209, %v1584, 0
        %v1629 = vsel %vm209, %v1585, 0
        %v1632 = vsel %vm209, %v1586, 0
        %v1635 = vsel %vm209, %v1587, 0
        %v1638 = vsel %vm209, %v1588, 0
        %v1641 = vsel %vm209, %v1589, 0
        %v1644 = vsel %vm209, %v1590, 0
        %v1647 = vsel %vm209, %v1591, 0
        %v1650 = vsel %vm209, %v1592, 0
        %v1653 = vsel %vm209, %v1593, 0
        %v1656 = vsel %vm209, %v1594, 0
        %v1659 = vsel %vm209, %v1595, 0
        %v1662 = vsel %vm209, %v1596, 0
        %v1665 = vsel %vm209, %v1597, 0
        %v1668 = vsel %vm209, %v1598, 0
        %v1671 = vsel %vm209, %v1599, 0
        %v1674 = vsel %vm209, %v1600, 0
        %v1677 = vsel %vm209, %v1601, 0
        %v1680 = vsel %vm209, %v1602, 0
        %v1683 = vsel %vm209, %v1603, 0
        %v1686 = vsel %vm209, %v1604, 0
        %v1689 = vsel %vm209, %v1605, 0
        %v1692 = vsel %vm209, %v1606, 0
        %v1695 = vsel %vm209, %v1607, 0
        %v1698 = vsel %vm209, %v1608, 0
        %v1701 = vsel %vm209, %v1609, 0
        %v1704 = vsel %vm209, %v1610, 0
        %v1707 = vsel %vm209, %v1611, 0
        %v1710 = vsel %vm209, %v1612, 0
        %v1713 = vsel %vm209, %v1613, 0
        %1715 = vmatprep.subr.mxu0 0.0
        %1716 = vmatpush1.xpose.msra.mxu0 %v1620
        %1717 = vmatprep.subr.mxu0 0.0
        %1718 = vmatpush1.xpose.msra.mxu0 %v1623
        %1719 = vmatprep.subr.mxu0 0.0
        %1720 = vmatpush1.xpose.msra.mxu0 %v1626
        %1721 = vmatprep.subr.mxu0 0.0
        %1722 = vmatpush1.xpose.msra.mxu0 %v1629
        %1723 = vmatprep.subr.mxu0 0.0
        %1724 = vmatpush1.xpose.msra.mxu0 %v1632
        %1725 = vmatprep.subr.mxu0 0.0
        %1726 = vmatpush1.xpose.msra.mxu0 %v1635
        %1727 = vmatprep.subr.mxu0 0.0
        %1728 = vmatpush1.xpose.msra.mxu0 %v1638
        %1729 = vmatprep.subr.mxu0 0.0
        %1730 = vmatpush1.xpose.msra.mxu0 %v1641
        %1731 = vmatprep.subr.mxu0 0.0
        %1732 = vmatpush1.xpose.msra.mxu0 %v1644
        %1733 = vmatprep.subr.mxu0 0.0
        %1734 = vmatpush1.xpose.msra.mxu0 %v1647
        %1735 = vmatprep.subr.mxu0 0.0
        %1736 = vmatpush1.xpose.msra.mxu0 %v1650
        %1737 = vmatprep.subr.mxu0 0.0
        %1738 = vmatpush1.xpose.msra.mxu0 %v1653
        %1739 = vmatprep.subr.mxu0 0.0
        %1740 = vmatpush1.xpose.msra.mxu0 %v1656
        %1741 = vmatprep.subr.mxu0 0.0
        %1742 = vmatpush1.xpose.msra.mxu0 %v1659
        %1743 = vmatprep.subr.mxu0 0.0
        %1744 = vmatpush1.xpose.msra.mxu0 %v1662
        %1745 = vmatprep.subr.mxu0 0.0
        %1746 = vmatpush1.xpose.msra.mxu0 %v1665
        %1747 = vmatprep.subr.mxu0 0.0
        %1748 = vmatpush1.xpose.msra.mxu0 %v1668
        %1749 = vmatprep.subr.mxu0 0.0
        %1750 = vmatpush1.xpose.msra.mxu0 %v1671
        %1751 = vmatprep.subr.mxu0 0.0
        %1752 = vmatpush1.xpose.msra.mxu0 %v1674
        %1753 = vmatprep.subr.mxu0 0.0
        %1754 = vmatpush1.xpose.msra.mxu0 %v1677
        %1755 = vmatprep.subr.mxu0 0.0
        %1756 = vmatpush1.xpose.msra.mxu0 %v1680
        %1757 = vmatprep.subr.mxu0 0.0
        %1758 = vmatpush1.xpose.msra.mxu0 %v1683
        %1759 = vmatprep.subr.mxu0 0.0
        %1760 = vmatpush1.xpose.msra.mxu0 %v1686
        %1761 = vmatprep.subr.mxu0 0.0
        %1762 = vmatpush1.xpose.msra.mxu0 %v1689
        %1763 = vmatprep.subr.mxu0 0.0
        %1764 = vmatpush1.xpose.msra.mxu0 %v1692
        %1765 = vmatprep.subr.mxu0 0.0
        %1766 = vmatpush1.xpose.msra.mxu0 %v1695
        %1767 = vmatprep.subr.mxu0 0.0
        %1768 = vmatpush1.xpose.msra.mxu0 %v1698
        %1769 = vmatprep.subr.mxu0 0.0
        %1770 = vmatpush1.xpose.msra.mxu0 %v1701
        %1771 = vmatprep.subr.mxu0 0.0
        %1772 = vmatpush1.xpose.msra.mxu0 %v1704
        %1773 = vmatprep.subr.mxu0 0.0
        %1774 = vmatpush1.xpose.msra.mxu0 %v1707
        %1775 = vmatprep.subr.mxu0 0.0
        %1776 = vmatpush1.xpose.msra.mxu0 %v1710
        %1777 = vmatprep.subr.mxu0 0.0
        %1778 = vmatpush1.xpose.msra.mxu0 %v1713
        %1779 = vmatprep.mubr.f32.mxu0 0.0
        %1780 = vmatmul.mubr.f32.gmra.mrb[0].mxu0 %v1617
        %v1781 = vpop.f32.mrb[0].mxu0
        %v1782 = vadd.f32 0.0, %v1781
        %v1783 = vpop.f32.mrb[0].mxu0
        %v1784 = vadd.f32 0.0, %v1783
        %1785 = vdwg.mxu0
        %v1786 = vadd.f32 %v1580, %v1782
        %v1787 = vadd.f32 %v1581, %v1784
        %v1788 = vld [vmem:[%s1375 + $0x2] sm:$0xff]
        %v1789 = vld [vmem:[%s1375 + $0xa] sm:$0xff]
        %v1790 = vld [vmem:[%s1375 + $0x1a] sm:$0xff]
        %v1791 = vld [vmem:[%s1375 + $0x22] sm:$0xff]
        %v1792 = vld [vmem:[%s1375 + $0x32] sm:$0xff]
        %v1793 = vld [vmem:[%s1375 + $0x3a] sm:$0xff]
        %v1794 = vld [vmem:[%s1375 + $0x4a] sm:$0xff]
        %v1795 = vld [vmem:[%s1375 + $0x52] sm:$0xff]
        %v1796 = vld [vmem:[%s1375 + $0x62] sm:$0xff]
        %v1797 = vld [vmem:[%s1375 + $0x6a] sm:$0xff]
        %v1798 = vld [vmem:[%s1375 + $0x7a] sm:$0xff]
        %v1799 = vld [vmem:[%s1375 + $0x82] sm:$0xff]
        %v1800 = vld [vmem:[%s1375 + $0x92] sm:$0xff]
        %v1801 = vld [vmem:[%s1375 + $0x9a] sm:$0xff]
        %v1802 = vld [vmem:[%s1375 + $0xaa] sm:$0xff]
        %v1803 = vld [vmem:[%s1375 + $0xb2] sm:$0xff]
        %v1804 = vld [vmem:[%s1375 + $0xc2] sm:$0xff]
        %v1805 = vld [vmem:[%s1375 + $0xca] sm:$0xff]
        %v1806 = vld [vmem:[%s1375 + $0xda] sm:$0xff]
        %v1807 = vld [vmem:[%s1375 + $0xe2] sm:$0xff]
        %v1808 = vld [vmem:[%s1375 + $0xf2] sm:$0xff]
        %v1809 = vld [vmem:[%s1375 + $0xfa] sm:$0xff]
        %v1810 = vld [vmem:[%s1375 + $0x10a] sm:$0xff]
        %v1811 = vld [vmem:[%s1375 + $0x112] sm:$0xff]
        %v1812 = vld [vmem:[%s1375 + $0x122] sm:$0xff]
        %v1813 = vld [vmem:[%s1375 + $0x12a] sm:$0xff]
        %v1814 = vld [vmem:[%s1375 + $0x13a] sm:$0xff]
        %v1815 = vld [vmem:[%s1375 + $0x142] sm:$0xff]
        %v1816 = vld [vmem:[%s1375 + $0x152] sm:$0xff]
        %v1817 = vld [vmem:[%s1375 + $0x15a] sm:$0xff]
        %v1818 = vld [vmem:[%s1375 + $0x16a] sm:$0xff]
        %v1819 = vld [vmem:[%s1375 + $0x172] sm:$0xff]
        %s1820 = scalar_lea.vmem %s1, 64
        %v1821 = vld [vmem:[%s1820] sm:$0xff]
        %v1823 = vsel %vm209, %v1821, 0
        %v1826 = vsel %vm209, %v1788, 0
        %v1829 = vsel %vm209, %v1789, 0
        %v1832 = vsel %vm209, %v1790, 0
        %v1835 = vsel %vm209, %v1791, 0
        %v1838 = vsel %vm209, %v1792, 0
        %v1841 = vsel %vm209, %v1793, 0
        %v1844 = vsel %vm209, %v1794, 0
        %v1847 = vsel %vm209, %v1795, 0
        %v1850 = vsel %vm209, %v1796, 0
        %v1853 = vsel %vm209, %v1797, 0
        %v1856 = vsel %vm209, %v1798, 0
        %v1859 = vsel %vm209, %v1799, 0
        %v1862 = vsel %vm209, %v1800, 0
        %v1865 = vsel %vm209, %v1801, 0
        %v1868 = vsel %vm209, %v1802, 0
        %v1871 = vsel %vm209, %v1803, 0
        %v1874 = vsel %vm209, %v1804, 0
        %v1877 = vsel %vm209, %v1805, 0
        %v1880 = vsel %vm209, %v1806, 0
        %v1883 = vsel %vm209, %v1807, 0
        %v1886 = vsel %vm209, %v1808, 0
        %v1889 = vsel %vm209, %v1809, 0
        %v1892 = vsel %vm209, %v1810, 0
        %v1895 = vsel %vm209, %v1811, 0
        %v1898 = vsel %vm209, %v1812, 0
        %v1901 = vsel %vm209, %v1813, 0
        %v1904 = vsel %vm209, %v1814, 0
        %v1907 = vsel %vm209, %v1815, 0
        %v1910 = vsel %vm209, %v1816, 0
        %v1913 = vsel %vm209, %v1817, 0
        %v1916 = vsel %vm209, %v1818, 0
        %v1919 = vsel %vm209, %v1819, 0
        %1921 = vmatprep.subr.mxu0 0.0
        %1922 = vmatpush1.xpose.msra.mxu0 %v1826
        %1923 = vmatprep.subr.mxu0 0.0
        %1924 = vmatpush1.xpose.msra.mxu0 %v1829
        %1925 = vmatprep.subr.mxu0 0.0
        %1926 = vmatpush1.xpose.msra.mxu0 %v1832
        %1927 = vmatprep.subr.mxu0 0.0
        %1928 = vmatpush1.xpose.msra.mxu0 %v1835
        %1929 = vmatprep.subr.mxu0 0.0
        %1930 = vmatpush1.xpose.msra.mxu0 %v1838
        %1931 = vmatprep.subr.mxu0 0.0
        %1932 = vmatpush1.xpose.msra.mxu0 %v1841
        %1933 = vmatprep.subr.mxu0 0.0
        %1934 = vmatpush1.xpose.msra.mxu0 %v1844
        %1935 = vmatprep.subr.mxu0 0.0
        %1936 = vmatpush1.xpose.msra.mxu0 %v1847
        %1937 = vmatprep.subr.mxu0 0.0
        %1938 = vmatpush1.xpose.msra.mxu0 %v1850
        %1939 = vmatprep.subr.mxu0 0.0
        %1940 = vmatpush1.xpose.msra.mxu0 %v1853
        %1941 = vmatprep.subr.mxu0 0.0
        %1942 = vmatpush1.xpose.msra.mxu0 %v1856
        %1943 = vmatprep.subr.mxu0 0.0
        %1944 = vmatpush1.xpose.msra.mxu0 %v1859
        %1945 = vmatprep.subr.mxu0 0.0
        %1946 = vmatpush1.xpose.msra.mxu0 %v1862
        %1947 = vmatprep.subr.mxu0 0.0
        %1948 = vmatpush1.xpose.msra.mxu0 %v1865
        %1949 = vmatprep.subr.mxu0 0.0
        %1950 = vmatpush1.xpose.msra.mxu0 %v1868
        %1951 = vmatprep.subr.mxu0 0.0
        %1952 = vmatpush1.xpose.msra.mxu0 %v1871
        %1953 = vmatprep.subr.mxu0 0.0
        %1954 = vmatpush1.xpose.msra.mxu0 %v1874
        %1955 = vmatprep.subr.mxu0 0.0
        %1956 = vmatpush1.xpose.msra.mxu0 %v1877
        %1957 = vmatprep.subr.mxu0 0.0
        %1958 = vmatpush1.xpose.msra.mxu0 %v1880
        %1959 = vmatprep.subr.mxu0 0.0
        %1960 = vmatpush1.xpose.msra.mxu0 %v1883
        %1961 = vmatprep.subr.mxu0 0.0
        %1962 = vmatpush1.xpose.msra.mxu0 %v1886
        %1963 = vmatprep.subr.mxu0 0.0
        %1964 = vmatpush1.xpose.msra.mxu0 %v1889
        %1965 = vmatprep.subr.mxu0 0.0
        %1966 = vmatpush1.xpose.msra.mxu0 %v1892
        %1967 = vmatprep.subr.mxu0 0.0
        %1968 = vmatpush1.xpose.msra.mxu0 %v1895
        %1969 = vmatprep.subr.mxu0 0.0
        %1970 = vmatpush1.xpose.msra.mxu0 %v1898
        %1971 = vmatprep.subr.mxu0 0.0
        %1972 = vmatpush1.xpose.msra.mxu0 %v1901
        %1973 = vmatprep.subr.mxu0 0.0
        %1974 = vmatpush1.xpose.msra.mxu0 %v1904
        %1975 = vmatprep.subr.mxu0 0.0
        %1976 = vmatpush1.xpose.msra.mxu0 %v1907
        %1977 = vmatprep.subr.mxu0 0.0
        %1978 = vmatpush1.xpose.msra.mxu0 %v1910
        %1979 = vmatprep.subr.mxu0 0.0
        %1980 = vmatpush1.xpose.msra.mxu0 %v1913
        %1981 = vmatprep.subr.mxu0 0.0
        %1982 = vmatpush1.xpose.msra.mxu0 %v1916
        %1983 = vmatprep.subr.mxu0 0.0
        %1984 = vmatpush1.xpose.msra.mxu0 %v1919
        %1985 = vmatprep.mubr.f32.mxu0 0.0
        %1986 = vmatmul.mubr.f32.gmra.mrb[0].mxu0 %v1823
        %v1987 = vpop.f32.mrb[0].mxu0
        %v1988 = vadd.f32 0.0, %v1987
        %v1989 = vpop.f32.mrb[0].mxu0
        %v1990 = vadd.f32 0.0, %v1989
        %1991 = vdwg.mxu0
        %v1992 = vadd.f32 %v1786, %v1988
        %v1993 = vadd.f32 %v1787, %v1990
        %1994 = vst [vmem:[%s136] sm:$0xff] %v1992
        %1995 = vst [vmem:[%s136 + $0x8] sm:$0xff] %v1993
        %s1996 = sand.u32 %s71, 1
        %s1997 = scalar_lea.sflag [#allocation3], %s1996
        %s1998 = sand.u32 %s71, 1
        %s1999 = smul.addr %s1998, 16
        %s2000 = scalar_lea.vmem [#allocation2], %s1999
        // Predicated region
        $region29: #{tpu_custom_call.1} parent=27 // pred_check
          %p2001 = pneg %p81
        $region30: #{tpu_custom_call.1} parent=27 // pred_check_branch
          %2003 = sbr.rel (%p2001) target = $region32
        $region31: #{tpu_custom_call.1} parent=27 // pred_region
          %s2005 = ssub.s32 256, 256
          %2006 = vsyncadd %s1997, %s2005
          %s2007 = smul.addr %s16, 2
          %s2008 = smul.addr %s2007, 128
          %s2009 = scalar_lea.hbm %s2, %s2008
          %s2011 = sshll.u32 %s2000, 4
          %s2012 = int_to_ptr.vmem [resolvable:$true] %s2011
          %2014 = dma.vmem_to_hbm [thread:$0]  %s2012, 256, %s2009, %s1997
        $region32: #{tpu_custom_call.1} parent=27 // pred_fallthru
          _
      $region28: #{tpu_custom_call.1} parent=5 // pred_fallthru
        _
      %p2015 = scmp.le.s32.totalorder 2, %s11
      // Predicated region
      $region33: #{tpu_custom_call.1} parent=5 // pred_check
        %p2016 = pneg %p2015
      $region34: #{tpu_custom_call.1} parent=5 // pred_check_branch
        %2018 = sbr.rel (%p2016) target = $region36
      $region35: #{tpu_custom_call.1} parent=5 // pred_region
        %s2019 = ssub.s32 %s11, 2
        // Predicated region
        $region37: #{tpu_custom_call.1} parent=35 // pred_check
          %p2020 = pneg %p87
        $region38: #{tpu_custom_call.1} parent=35 // pred_check_branch
          %2022 = sbr.rel (%p2020) target = $region40
        $region39: #{tpu_custom_call.1} parent=35 // pred_region
          %s2023 = sand.u32 %s72, 1
          %s2024 = scalar_lea.sflag [#allocation3], %s2023
          %s2025 = sand.u32 %s72, 1
          %s2026 = smul.addr %s2025, 16
          %s2027 = scalar_lea.vmem [#allocation2], %s2026
          %2028 = dma.done %s2024, 256
        $region40: #{tpu_custom_call.1} parent=35 // pred_fallthru
          _
      $region36: #{tpu_custom_call.1} parent=5 // pred_fallthru
        _
    $region6: #{tpu_custom_call.1} parent=1 // loop_footer
      %s15 = sadd.s32 1, %s11
    $region7: #{tpu_custom_call.1} parent=1 // loop_footer_branch
      %10 = sbr.rel target = $region3
    $region8: #{tpu_custom_call.1} parent=1 // loop_exit
      _
    %2029 = vsyncpa [#allocation3], 1
    %s2030 = scalar_lea.sflag [#allocation3], 1
    %2031 = vsyncpa %s2030, 1

</llo_original>
